<compile_context>
chip_gen: v6e
topology: v6e:2x2x1
jax: 0.10.0
libtpu: 0.0.40
codegen_flags: <defaults>
</compile_context>

<pallas_src>
import functools

import jax
import jax.numpy as jnp
from jax.experimental import pallas as pl
from jax.experimental.pallas import tpu as pltpu

HIDDEN = 128
OUT = 3
SLAB = 8  # packed output width: [vel0, vel1, p, out0, out1, out2, 0, 0]


def _round_up(x, m):
    return (x + m - 1) // m * m


def _cdiv(a, b):
    return (a + b - 1) // b


def _decoder_kernel(v_ref, vel_ref,
                    w1_ref, b1_ref, w2_ref, b2_ref, w3_ref, b3_ref,
                    slab_ref):
    # MLP hot path: bf16 MXU inputs, f32 accumulation, f32 ReLU/bias.
    # (If the producer already supplies bf16 V, this cast is a no-op.)
    x = v_ref[...].astype(jnp.bfloat16)                                   # (tm, 128)
    h = jnp.dot(x, w1_ref[...], preferred_element_type=jnp.float32) + b1_ref[...]
    h = jnp.maximum(h, 0.0).astype(jnp.bfloat16)
    h = jnp.dot(h, w2_ref[...], preferred_element_type=jnp.float32) + b2_ref[...]
    h = jnp.maximum(h, 0.0).astype(jnp.bfloat16)
    # W3 is packed as [w0 w1 w2 | w0 w1 w2 | 0 0], so this single 128x8 matmul
    # produces [out0 out1 out2 out0 out1 out2 0 0].
    o = jnp.dot(h, w3_ref[...], preferred_element_type=jnp.float32) + b3_ref[...]

    # Lane-place velocity into columns 0-1 of the 8-wide slab (pure VPU work,
    # compute has large slack) and add it, yielding
    # [vel0+out0, vel1+out1, out2, out0, out1, out2, 0, 0].
    vel = vel_ref[...].astype(jnp.float32)                                # (tm, 2)
    lane = jax.lax.broadcasted_iota(jnp.int32, o.shape, 1)                # (tm, 8)
    velpad = jnp.where(lane == 0, vel[:, 0:1],
                       jnp.where(lane == 1, vel[:, 1:2], 0.0))
    slab_ref[...] = o + velpad                                            # (tm, 8)


@functools.partial(jax.jit, static_argnames=("tm", "return_packed"))
def decoder_forward(V, velocity, params, *, tm=4096, return_packed=False):
    """V: (B, N, 128) f32 or bf16, velocity: (B, N, 2).

    Returns (velocity, pressure, output) matching the PyTorch Decoder (or the
    packed (B, N, 8) slab if return_packed=True).  Matmuls use bf16 MXU inputs
    with f32 accumulation; the velocity/pressure epilogue is f32.
    """
    B, N, D = V.shape
    assert D == HIDDEN
    M = B * N

    w1, b1, w2, b2, w3, b3 = params

    # Pack W3/b3 into the 8-wide slab layout (duplicate the 3 output columns,
    # zero-pad to width 8).  Weights are tiny; cast once here.
    w3p = jnp.concatenate(
        [w3, w3, jnp.zeros((HIDDEN, SLAB - 2 * OUT), w3.dtype)], axis=1)
    b3p = jnp.concatenate(
        [b3, b3, jnp.zeros((1, SLAB - 2 * OUT), b3.dtype)], axis=1)
    w1b = w1.astype(jnp.bfloat16)
    w2b = w2.astype(jnp.bfloat16)
    w3b = w3p.astype(jnp.bfloat16)
    b1f = b1.astype(jnp.float32)
    b2f = b2.astype(jnp.float32)
    b3f = b3p.astype(jnp.float32)

    # Big row tiles amortize the ~0.35us per-grid-step overhead, but cap the
    # tile so there are >= 2 grid steps: the "parallel" row axis then shards
    # across both v7x TensorCores (harmless single extra step on v5e/v6e).
    tm_eff = min(tm, max(128, _round_up(_cdiv(M, 2), 128)))
    grid_m = _cdiv(M, tm_eff)

    # No padding, no dtype cast: raw views of the caller's arrays.  Pallas
    # masks the ragged last block (rows are independent).
    v_flat = V.reshape(M, D)
    vel_flat = velocity.reshape(M, 2)

    row_in = pl.BlockSpec((tm_eff, D), lambda i: (i, 0))
    row_vel = pl.BlockSpec((tm_eff, 2), lambda i: (i, 0))
    row_slab = pl.BlockSpec((tm_eff, SLAB), lambda i: (i, 0))
    full = lambda shape: pl.BlockSpec(shape, lambda i: (0, 0))

    slab = pl.pallas_call(
        _decoder_kernel,
        out_shape=jax.ShapeDtypeStruct((M, SLAB), jnp.float32),
        grid=(grid_m,),
        in_specs=[
            row_in,                       # V tile           (tm, 128)
            row_vel,                      # velocity tile    (tm, 2)
            full((D, HIDDEN)),            # W1               bf16 (resident)
            full((1, HIDDEN)),            # b1               f32
            full((HIDDEN, HIDDEN)),       # W2               bf16 (resident)
            full((1, HIDDEN)),            # b2               f32
            full((HIDDEN, SLAB)),         # packed W3        bf16
            full((1, SLAB)),              # packed b3        f32
        ],
        out_specs=row_slab,
        compiler_params=pltpu.CompilerParams(
            dimension_semantics=("parallel",),
            vmem_limit_bytes=32 * 1024 * 1024,
        ),
    )(v_flat, vel_flat, w1b, b1f, w2b, b2f, w3b, b3f)

    if return_packed:
        # Downstream consumers that can read the packed layout skip three
        # extra HBM passes over the output.
        return slab.reshape(B, N, SLAB)

    vel_out = slab[:, 0:2].reshape(B, N, 2)
    p_out = slab[:, 2:3].reshape(B, N, 1)
    out = slab[:, 3:3 + OUT].reshape(B, N, OUT)
    return vel_out, p_out, out


def init_params(key):
    """PyTorch nn.Linear-style init: U[-1/sqrt(fan_in), 1/sqrt(fan_in)]."""
    ks = jax.random.split(key, 6)

    def lin(kw, kb, fan_in, fan_out):
        bound = 1.0 / jnp.sqrt(fan_in)
        w = jax.random.uniform(kw, (fan_in, fan_out), jnp.float32, -bound, bound)
        b = jax.random.uniform(kb, (1, fan_out), jnp.float32, -bound, bound)
        return w, b

    w1, b1 = lin(ks[0], ks[1], HIDDEN, HIDDEN)
    w2, b2 = lin(ks[2], ks[3], HIDDEN, HIDDEN)
    w3, b3 = lin(ks[4], ks[5], HIDDEN, OUT)
    return (w1, b1, w2, b2, w3, b3)


def decoder_ref_f32(V, velocity, params):
    """Pure-f32 reference (exact PyTorch semantics)."""
    w1, b1, w2, b2, w3, b3 = params
    Vf = V.astype(jnp.float32)
    h = jnp.maximum(Vf @ w1 + b1[0], 0.0)
    h = jnp.maximum(h @ w2 + b2[0], 0.0)
    out = h @ w3 + b3[0]
    vel = velocity.astype(jnp.float32) + out[..., :2]
    p = out[..., -1:]
    return vel, p, out


def decoder_ref_matched(V, velocity, params):
    """Reference mirroring the kernel's bf16-input / f32-accumulate matmuls."""
    w1, b1, w2, b2, w3, b3 = params
    bf = jnp.bfloat16
    x = V.astype(bf)
    h = jnp.dot(x, w1.astype(bf), preferred_element_type=jnp.float32) + b1[0]
    h = jnp.maximum(h, 0.0).astype(bf)
    h = jnp.dot(h, w2.astype(bf), preferred_element_type=jnp.float32) + b2[0]
    h = jnp.maximum(h, 0.0).astype(bf)
    out = jnp.dot(h, w3.astype(bf), preferred_element_type=jnp.float32) + b3[0]
    vel = velocity.astype(jnp.float32) + out[..., :2]
    p = out[..., -1:]
    return vel, p, out


if __name__ == "__main__":
    key = jax.random.PRNGKey(0)
    k_p, k_v, k_vel = jax.random.split(key, 3)

    B, N = 2, 200  # M = 400 rows -> exercises the ragged last block + 2-step grid
    params = init_params(k_p)
    V = jax.random.normal(k_v, (B, N, HIDDEN), jnp.float32)
    velocity = jax.random.normal(k_vel, (B, N, 2), jnp.float32)

    vel_out, p_out, out = decoder_forward(V, velocity, params)
    jax.block_until_ready((vel_out, p_out, out))

    # Tight check vs. a reference with identical bf16-matmul numerics.
    vel_m, p_m, out_m = decoder_ref_matched(V, velocity, params)
    assert jnp.allclose(vel_out, vel_m, atol=1e-3, rtol=1e-3)
    assert jnp.allclose(p_out, p_m, atol=1e-3, rtol=1e-3)
    assert jnp.allclose(out, out_m, atol=1e-3, rtol=1e-3)

    # Loose check vs. the pure-f32 PyTorch-equivalent reference (bf16 MXU
    # inputs introduce ~1e-2-level relative error by design).
    vel_r, p_r, out_r = decoder_ref_f32(V, velocity, params)
    assert jnp.allclose(vel_out, vel_r, atol=1e-1, rtol=1e-1)
    assert jnp.allclose(p_out, p_r, atol=1e-1, rtol=1e-1)
    assert jnp.allclose(out, out_r, atol=1e-1, rtol=1e-1)

    # bf16-producer path: V already bf16 halves the dominant HBM stream and
    # must produce the same (bf16-matched) result.
    vel_b, p_b, out_b = decoder_forward(V.astype(jnp.bfloat16), velocity, params)
    jax.block_until_ready((vel_b, p_b, out_b))
    assert jnp.allclose(vel_b, vel_m, atol=1e-3, rtol=1e-3)
    assert jnp.allclose(out_b, out_m, atol=1e-3, rtol=1e-3)

    # Packed-slab return path (lets downstream skip the unpack slices).
    slab = decoder_forward(V, velocity, params, return_packed=True)
    jax.block_until_ready(slab)
    assert jnp.allclose(slab[..., 0:2], vel_m, atol=1e-3, rtol=1e-3)

    print("KERNEL_OK")
</pallas_src>

<mosaic_0001>
module attributes {stable_mosaic.version = 11 : i64} {
  func.func @_decoder_kernel(%arg0: i32, %arg1: memref<256x128xf32, #tpu.memory_space<vmem>>, %arg2: memref<256x2xf32, #tpu.memory_space<vmem>>, %arg3: memref<128x128xbf16, #tpu.memory_space<vmem>>, %arg4: memref<1x128xf32, #tpu.memory_space<vmem>>, %arg5: memref<128x128xbf16, #tpu.memory_space<vmem>>, %arg6: memref<1x128xf32, #tpu.memory_space<vmem>>, %arg7: memref<128x8xbf16, #tpu.memory_space<vmem>>, %arg8: memref<1x8xf32, #tpu.memory_space<vmem>>, %arg9: memref<256x8xf32, #tpu.memory_space<vmem>>) attributes {dimension_semantics = [#tpu.dimension_semantics<parallel>], iteration_bounds = array<i64: 2>, scalar_prefetch = 0 : i64, scratch_operands = 0 : i64, tpu.core_type = #tpu.core_type<tc>, window_params = [{transform_indices = @transform_0, window_bounds = array<i64: 256, 128>}, {transform_indices = @transform_1, window_bounds = array<i64: 256, 2>}, {pipeline_mode = #tpu.pipeline_mode<synchronous>, transform_indices = @transform_2, window_bounds = array<i64: 128, 128>}, {pipeline_mode = #tpu.pipeline_mode<synchronous>, transform_indices = @transform_3, window_bounds = array<i64: 1, 128>}, {pipeline_mode = #tpu.pipeline_mode<synchronous>, transform_indices = @transform_4, window_bounds = array<i64: 128, 128>}, {pipeline_mode = #tpu.pipeline_mode<synchronous>, transform_indices = @transform_5, window_bounds = array<i64: 1, 128>}, {pipeline_mode = #tpu.pipeline_mode<synchronous>, transform_indices = @transform_6, window_bounds = array<i64: 128, 8>}, {pipeline_mode = #tpu.pipeline_mode<synchronous>, transform_indices = @transform_7, window_bounds = array<i64: 1, 8>}, {transform_indices = @transform_8, window_bounds = array<i64: 256, 8>}]} {
    %c0 = arith.constant 0 : index
    %c0_0 = arith.constant 0 : index
    %0 = vector.load %arg1[%c0, %c0_0] : memref<256x128xf32, #tpu.memory_space<vmem>>, vector<256x128xf32>
    %1 = arith.truncf %0 : vector<256x128xf32> to vector<256x128xbf16>
    %c0_1 = arith.constant 0 : index
    %c0_2 = arith.constant 0 : index
    %2 = vector.load %arg3[%c0_1, %c0_2] : memref<128x128xbf16, #tpu.memory_space<vmem>>, vector<128x128xbf16>
    %cst = arith.constant dense<0.000000e+00> : vector<256x128xf32>
    %3 = tpu.matmul %1, %2, %cst {dimension_numbers = #tpu.dot_dimension_numbers<[1], [0], [0], [1], [0, 0, 1, 1], [], []>} : vector<256x128xbf16>, vector<128x128xbf16>, vector<256x128xf32> -> vector<256x128xf32>
    %c0_3 = arith.constant 0 : index
    %c0_4 = arith.constant 0 : index
    %4 = vector.load %arg4[%c0_3, %c0_4] : memref<1x128xf32, #tpu.memory_space<vmem>>, vector<1x128xf32>
    %5 = vector.broadcast %4 : vector<1x128xf32> to vector<256x128xf32>
    %6 = arith.addf %3, %5 : vector<256x128xf32>
    %cst_5 = arith.constant 0.000000e+00 : f32
    %7 = vector.broadcast %cst_5 : f32 to vector<256x128xf32>
    %8 = arith.maximumf %6, %7 : vector<256x128xf32>
    %9 = arith.truncf %8 : vector<256x128xf32> to vector<256x128xbf16>
    %c0_6 = arith.constant 0 : index
    %c0_7 = arith.constant 0 : index
    %10 = vector.load %arg5[%c0_6, %c0_7] : memref<128x128xbf16, #tpu.memory_space<vmem>>, vector<128x128xbf16>
    %cst_8 = arith.constant dense<0.000000e+00> : vector<256x128xf32>
    %11 = tpu.matmul %9, %10, %cst_8 {dimension_numbers = #tpu.dot_dimension_numbers<[1], [0], [0], [1], [0, 0, 1, 1], [], []>} : vector<256x128xbf16>, vector<128x128xbf16>, vector<256x128xf32> -> vector<256x128xf32>
    %c0_9 = arith.constant 0 : index
    %c0_10 = arith.constant 0 : index
    %12 = vector.load %arg6[%c0_9, %c0_10] : memref<1x128xf32, #tpu.memory_space<vmem>>, vector<1x128xf32>
    %13 = vector.broadcast %12 : vector<1x128xf32> to vector<256x128xf32>
    %14 = arith.addf %11, %13 : vector<256x128xf32>
    %cst_11 = arith.constant 0.000000e+00 : f32
    %15 = vector.broadcast %cst_11 : f32 to vector<256x128xf32>
    %16 = arith.maximumf %14, %15 : vector<256x128xf32>
    %17 = arith.truncf %16 : vector<256x128xf32> to vector<256x128xbf16>
    %c0_12 = arith.constant 0 : index
    %c0_13 = arith.constant 0 : index
    %18 = vector.load %arg7[%c0_12, %c0_13] : memref<128x8xbf16, #tpu.memory_space<vmem>>, vector<128x8xbf16>
    %cst_14 = arith.constant dense<0.000000e+00> : vector<256x8xf32>
    %19 = tpu.matmul %17, %18, %cst_14 {dimension_numbers = #tpu.dot_dimension_numbers<[1], [0], [0], [1], [0, 0, 1, 1], [], []>} : vector<256x128xbf16>, vector<128x8xbf16>, vector<256x8xf32> -> vector<256x8xf32>
    %c0_15 = arith.constant 0 : index
    %c0_16 = arith.constant 0 : index
    %20 = vector.load %arg8[%c0_15, %c0_16] : memref<1x8xf32, #tpu.memory_space<vmem>>, vector<1x8xf32>
    %21 = vector.broadcast %20 : vector<1x8xf32> to vector<256x8xf32>
    %22 = arith.addf %19, %21 : vector<256x8xf32>
    %c0_17 = arith.constant 0 : index
    %c0_18 = arith.constant 0 : index
    %23 = vector.load %arg2[%c0_17, %c0_18] : memref<256x2xf32, #tpu.memory_space<vmem>>, vector<256x2xf32>
    %24 = tpu.iota {dimensions = array<i32: 1>} : vector<256x8xi32>
    %c0_i32 = arith.constant 0 : i32
    %25 = vector.broadcast %c0_i32 : i32 to vector<256x8xi32>
    %26 = arith.cmpi eq, %24, %25 : vector<256x8xi32>
    %27 = vector.extract_strided_slice %23 {offsets = [0, 0], sizes = [256, 1], strides = [1, 1]} : vector<256x2xf32> to vector<256x1xf32>
    %c1_i32 = arith.constant 1 : i32
    %28 = vector.broadcast %c1_i32 : i32 to vector<256x8xi32>
    %29 = arith.cmpi eq, %24, %28 : vector<256x8xi32>
    %30 = vector.extract_strided_slice %23 {offsets = [0, 1], sizes = [256, 1], strides = [1, 1]} : vector<256x2xf32> to vector<256x1xf32>
    %cst_19 = arith.constant 0.000000e+00 : f32
    %31 = vector.shape_cast %30 : vector<256x1xf32> to vector<256x1xf32>
    %32 = vector.broadcast %31 : vector<256x1xf32> to vector<256x8xf32>
    %33 = vector.broadcast %cst_19 : f32 to vector<256x8xf32>
    %34 = arith.select %29, %32, %33 : vector<256x8xi1>, vector<256x8xf32>
    %35 = vector.shape_cast %27 : vector<256x1xf32> to vector<256x1xf32>
    %36 = vector.broadcast %35 : vector<256x1xf32> to vector<256x8xf32>
    %37 = arith.select %26, %36, %34 : vector<256x8xi1>, vector<256x8xf32>
    %38 = arith.addf %22, %37 : vector<256x8xf32>
    %c0_20 = arith.constant 0 : index
    %c0_21 = arith.constant 0 : index
    %39 = vector.load %arg9[%c0_20, %c0_21] : memref<256x8xf32, #tpu.memory_space<vmem>>, vector<256x8xf32>
    tpu.vector_store %arg9[%c0_20, %c0_21], %38 {strides = array<i32>} : memref<256x8xf32, #tpu.memory_space<vmem>>, vector<256x8xf32>,
    return
  }
  func.func @transform_0(%arg0: i32) -> (i32, i32) {
    %c0_i32 = arith.constant 0 : i32
    %c0_i32_0 = arith.constant 0 : i32
    return %arg0, %c0_i32 : i32, i32
  }
  func.func @transform_1(%arg0: i32) -> (i32, i32) {
    %c0_i32 = arith.constant 0 : i32
    %c0_i32_0 = arith.constant 0 : i32
    return %arg0, %c0_i32 : i32, i32
  }
  func.func @transform_2(%arg0: i32) -> (i32, i32) {
    %c0_i32 = arith.constant 0 : i32
    %c0_i32_0 = arith.constant 0 : i32
    %c0_i32_1 = arith.constant 0 : i32
    return %c0_i32, %c0_i32_0 : i32, i32
  }
  func.func @transform_3(%arg0: i32) -> (i32, i32) {
    %c0_i32 = arith.constant 0 : i32
    %c0_i32_0 = arith.constant 0 : i32
    %c0_i32_1 = arith.constant 0 : i32
    return %c0_i32, %c0_i32_0 : i32, i32
  }
  func.func @transform_4(%arg0: i32) -> (i32, i32) {
    %c0_i32 = arith.constant 0 : i32
    %c0_i32_0 = arith.constant 0 : i32
    %c0_i32_1 = arith.constant 0 : i32
    return %c0_i32, %c0_i32_0 : i32, i32
  }
  func.func @transform_5(%arg0: i32) -> (i32, i32) {
    %c0_i32 = arith.constant 0 : i32
    %c0_i32_0 = arith.constant 0 : i32
    %c0_i32_1 = arith.constant 0 : i32
    return %c0_i32, %c0_i32_0 : i32, i32
  }
  func.func @transform_6(%arg0: i32) -> (i32, i32) {
    %c0_i32 = arith.constant 0 : i32
    %c0_i32_0 = arith.constant 0 : i32
    %c0_i32_1 = arith.constant 0 : i32
    return %c0_i32, %c0_i32_0 : i32, i32
  }
  func.func @transform_7(%arg0: i32) -> (i32, i32) {
    %c0_i32 = arith.constant 0 : i32
    %c0_i32_0 = arith.constant 0 : i32
    %c0_i32_1 = arith.constant 0 : i32
    return %c0_i32, %c0_i32_0 : i32, i32
  }
  func.func @transform_8(%arg0: i32) -> (i32, i32) {
    %c0_i32 = arith.constant 0 : i32
    %c0_i32_0 = arith.constant 0 : i32
    return %arg0, %c0_i32 : i32, i32
  }
}

</mosaic_0001>

<llo_original>
// kernel: decoder_forward.1
$region0: #{decoder_forward.1}
  #allocation0 [shape = 'u32[]', space=smem, size = 0x4, offset = 0x4, fixed_abs, tag = 'smem constant byte address 0x4 - core index']
  #allocation1 [shape = 'u32[144,128]{1,0:T(1,128)}', space=vmem, size = 0x12000, scoped, tag = 'internal scratch']
  %s0 = inlined_call_operand.vmem [shape: f32[400,128], index: 0, kind: input, shape index: {}]
  %s1 = inlined_call_operand.vmem [shape: f32[400,2], index: 1, kind: input, shape index: {}]
  %s2 = inlined_call_operand.vmem [shape: bf16[128,128], index: 2, kind: input, shape index: {}]
  %s3 = inlined_call_operand.vmem [shape: f32[1,128], index: 3, kind: input, shape index: {}]
  %s4 = inlined_call_operand.vmem [shape: bf16[128,128], index: 4, kind: input, shape index: {}]
  %s5 = inlined_call_operand.vmem [shape: f32[1,128], index: 5, kind: input, shape index: {}]
  %s6 = inlined_call_operand.vmem [shape: bf16[128,8], index: 6, kind: input, shape index: {}]
  %s7 = inlined_call_operand.vmem [shape: f32[1,8], index: 7, kind: input, shape index: {}]
  %s8 = inlined_call_operand.vmem [shape: f32[400,8], index: 8, kind: output, shape index: {}]
  %s9 = sld [smem:[#allocation0]]
  $region113: #{decoder_forward.1} parent=0
    _
  %s11 = ssub.s32 1, %s9
  %s12 = scalar_select 0, %s11, %s9
  $region1: #{decoder_forward.1} parent=0
    #allocation2 [shape = 'u8[262144]{0}', space=vmem, size = 0x40000, scoped, tag = 'output window, operand 0']
    loop: start=0, step=1, limit=4
    $region2: #{decoder_forward.1} parent=1 // loop_pre_header
      _
    $region3: #{decoder_forward.1} parent=1 // loop_header
      %s14 = sphi 0, %s18
      %p15 = scmp.ge.s32.totalorder %s14, 4
      %s24 = sphi 0, %s26
      %s27 = sphi 0, %s24
      %s28 = sphi 0, %s27
      %s44 = sphi 0, %s28
      %s50 = sphi 0, %s52
      %s53 = sphi 0, %s50
      %s54 = sphi 0, %s53
      %s70 = sphi 0, %s54
      %s74 = sphi 0, %s74
      %s76 = sphi 0, %s74
      %s77 = sphi 0, %s76
      %s91 = sphi 0, %s77
      %s95 = sphi 0, %s95
      %s97 = sphi 0, %s95
      %s98 = sphi 0, %s97
      %s112 = sphi 0, %s98
      %s116 = sphi 0, %s116
      %s118 = sphi 0, %s116
      %s119 = sphi 0, %s118
      %s133 = sphi 0, %s119
      %s137 = sphi 0, %s137
      %s139 = sphi 0, %s137
      %s140 = sphi 0, %s139
      %s154 = sphi 0, %s140
      %s158 = sphi 0, %s158
      %s160 = sphi 0, %s158
      %s161 = sphi 0, %s160
      %s175 = sphi 0, %s161
      %s179 = sphi 0, %s179
      %s181 = sphi 0, %s179
      %s182 = sphi 0, %s181
      %s196 = sphi 0, %s182
      %s202 = sphi 0, %s204
      %s205 = sphi 0, %s202
      %s206 = sphi 0, %s205
      %s222 = sphi 0, %s206
    $region4: #{decoder_forward.1} parent=1 // loop_header_branch
      %17 = sbr.rel (%p15) target = $region8
    $region5: #{decoder_forward.1} parent=1 // loop_body
      %s19 = ssub.s32 %s14, 1
      %s20 = ssub.s32 %s14, 2
      %s21 = sadd.s32 %s14, 1
      %s22 = ssub.s32 %s14, %s21
      %p23 = scmp.eq.s32.totalorder %s22, 0
      %s25 = sadd.s32 %s24, 1
      %s26 = scalar_select %p23, %s24, %s25
      %p29 = pneg %p23
      %p30 = scmp.eq.s32.totalorder %s14, 1
      %p31 = por %p29, %p30
      %p32 = scmp.ne.s32.totalorder %s24, %s27
      %p33 = scmp.eq.s32.totalorder %s14, 0
      %p34 = por %p32, %p33
      %p35 = scmp.ne.s32.totalorder %s24, %s27
      %p36 = scmp.eq.s32.totalorder %s19, 1
      %p37 = por %p35, %p36
      %p38 = scmp.ne.s32.totalorder %s27, %s28
      %p39 = scmp.eq.s32.totalorder %s19, 0
      %p40 = por %p38, %p39
      %p41 = scmp.ne.s32.totalorder %s27, %s28
      %p42 = scmp.eq.s32.totalorder %s20, 1
      %p43 = por %p41, %p42
      %p45 = scmp.ne.s32.totalorder %s28, %s44
      %p46 = scmp.eq.s32.totalorder %s20, 0
      %p47 = por %p45, %p46
      %s48 = ssub.s32 %s14, %s21
      %p49 = scmp.eq.s32.totalorder %s48, 0
      %s51 = sadd.s32 %s50, 1
      %s52 = scalar_select %p49, %s50, %s51
      %p55 = pneg %p49
      %p56 = scmp.eq.s32.totalorder %s14, 1
      %p57 = por %p55, %p56
      %p58 = scmp.ne.s32.totalorder %s50, %s53
      %p59 = scmp.eq.s32.totalorder %s14, 0
      %p60 = por %p58, %p59
      %p61 = scmp.ne.s32.totalorder %s50, %s53
      %p62 = scmp.eq.s32.totalorder %s19, 1
      %p63 = por %p61, %p62
      %p64 = scmp.ne.s32.totalorder %s53, %s54
      %p65 = scmp.eq.s32.totalorder %s19, 0
      %p66 = por %p64, %p65
      %p67 = scmp.ne.s32.totalorder %s53, %s54
      %p68 = scmp.eq.s32.totalorder %s20, 1
      %p69 = por %p67, %p68
      %p71 = scmp.ne.s32.totalorder %s54, %s70
      %p72 = scmp.eq.s32.totalorder %s20, 0
      %p73 = por %p71, %p72
      %s75 = sadd.s32 %s74, 1
      %p78 = scmp.eq.s32.totalorder %s14, 1
      %p79 = scmp.ne.s32.totalorder %s74, %s76
      %p80 = scmp.eq.s32.totalorder %s14, 0
      %p81 = por %p79, %p80
      %p82 = scmp.ne.s32.totalorder %s74, %s76
      %p83 = scmp.eq.s32.totalorder %s19, 1
      %p84 = por %p82, %p83
      %p85 = scmp.ne.s32.totalorder %s76, %s77
      %p86 = scmp.eq.s32.totalorder %s19, 0
      %p87 = por %p85, %p86
      %p88 = scmp.ne.s32.totalorder %s76, %s77
      %p89 = scmp.eq.s32.totalorder %s20, 1
      %p90 = por %p88, %p89
      %p92 = scmp.ne.s32.totalorder %s77, %s91
      %p93 = scmp.eq.s32.totalorder %s20, 0
      %p94 = por %p92, %p93
      %s96 = sadd.s32 %s95, 1
      %p99 = scmp.eq.s32.totalorder %s14, 1
      %p100 = scmp.ne.s32.totalorder %s95, %s97
      %p101 = scmp.eq.s32.totalorder %s14, 0
      %p102 = por %p100, %p101
      %p103 = scmp.ne.s32.totalorder %s95, %s97
      %p104 = scmp.eq.s32.totalorder %s19, 1
      %p105 = por %p103, %p104
      %p106 = scmp.ne.s32.totalorder %s97, %s98
      %p107 = scmp.eq.s32.totalorder %s19, 0
      %p108 = por %p106, %p107
      %p109 = scmp.ne.s32.totalorder %s97, %s98
      %p110 = scmp.eq.s32.totalorder %s20, 1
      %p111 = por %p109, %p110
      %p113 = scmp.ne.s32.totalorder %s98, %s112
      %p114 = scmp.eq.s32.totalorder %s20, 0
      %p115 = por %p113, %p114
      %s117 = sadd.s32 %s116, 1
      %p120 = scmp.eq.s32.totalorder %s14, 1
      %p121 = scmp.ne.s32.totalorder %s116, %s118
      %p122 = scmp.eq.s32.totalorder %s14, 0
      %p123 = por %p121, %p122
      %p124 = scmp.ne.s32.totalorder %s116, %s118
      %p125 = scmp.eq.s32.totalorder %s19, 1
      %p126 = por %p124, %p125
      %p127 = scmp.ne.s32.totalorder %s118, %s119
      %p128 = scmp.eq.s32.totalorder %s19, 0
      %p129 = por %p127, %p128
      %p130 = scmp.ne.s32.totalorder %s118, %s119
      %p131 = scmp.eq.s32.totalorder %s20, 1
      %p132 = por %p130, %p131
      %p134 = scmp.ne.s32.totalorder %s119, %s133
      %p135 = scmp.eq.s32.totalorder %s20, 0
      %p136 = por %p134, %p135
      %s138 = sadd.s32 %s137, 1
      %p141 = scmp.eq.s32.totalorder %s14, 1
      %p142 = scmp.ne.s32.totalorder %s137, %s139
      %p143 = scmp.eq.s32.totalorder %s14, 0
      %p144 = por %p142, %p143
      %p145 = scmp.ne.s32.totalorder %s137, %s139
      %p146 = scmp.eq.s32.totalorder %s19, 1
      %p147 = por %p145, %p146
      %p148 = scmp.ne.s32.totalorder %s139, %s140
      %p149 = scmp.eq.s32.totalorder %s19, 0
      %p150 = por %p148, %p149
      %p151 = scmp.ne.s32.totalorder %s139, %s140
      %p152 = scmp.eq.s32.totalorder %s20, 1
      %p153 = por %p151, %p152
      %p155 = scmp.ne.s32.totalorder %s140, %s154
      %p156 = scmp.eq.s32.totalorder %s20, 0
      %p157 = por %p155, %p156
      %s159 = sadd.s32 %s158, 1
      %p162 = scmp.eq.s32.totalorder %s14, 1
      %p163 = scmp.ne.s32.totalorder %s158, %s160
      %p164 = scmp.eq.s32.totalorder %s14, 0
      %p165 = por %p163, %p164
      %p166 = scmp.ne.s32.totalorder %s158, %s160
      %p167 = scmp.eq.s32.totalorder %s19, 1
      %p168 = por %p166, %p167
      %p169 = scmp.ne.s32.totalorder %s160, %s161
      %p170 = scmp.eq.s32.totalorder %s19, 0
      %p171 = por %p169, %p170
      %p172 = scmp.ne.s32.totalorder %s160, %s161
      %p173 = scmp.eq.s32.totalorder %s20, 1
      %p174 = por %p172, %p173
      %p176 = scmp.ne.s32.totalorder %s161, %s175
      %p177 = scmp.eq.s32.totalorder %s20, 0
      %p178 = por %p176, %p177
      %s180 = sadd.s32 %s179, 1
      %p183 = scmp.eq.s32.totalorder %s14, 1
      %p184 = scmp.ne.s32.totalorder %s179, %s181
      %p185 = scmp.eq.s32.totalorder %s14, 0
      %p186 = por %p184, %p185
      %p187 = scmp.ne.s32.totalorder %s179, %s181
      %p188 = scmp.eq.s32.totalorder %s19, 1
      %p189 = por %p187, %p188
      %p190 = scmp.ne.s32.totalorder %s181, %s182
      %p191 = scmp.eq.s32.totalorder %s19, 0
      %p192 = por %p190, %p191
      %p193 = scmp.ne.s32.totalorder %s181, %s182
      %p194 = scmp.eq.s32.totalorder %s20, 1
      %p195 = por %p193, %p194
      %p197 = scmp.ne.s32.totalorder %s182, %s196
      %p198 = scmp.eq.s32.totalorder %s20, 0
      %p199 = por %p197, %p198
      %s200 = ssub.s32 %s14, %s21
      %p201 = scmp.eq.s32.totalorder %s200, 0
      %s203 = sadd.s32 %s202, 1
      %s204 = scalar_select %p201, %s202, %s203
      %p207 = pneg %p201
      %p208 = scmp.eq.s32.totalorder %s14, 1
      %p209 = por %p207, %p208
      %p210 = scmp.ne.s32.totalorder %s202, %s205
      %p211 = scmp.eq.s32.totalorder %s14, 0
      %p212 = por %p210, %p211
      %p213 = scmp.ne.s32.totalorder %s202, %s205
      %p214 = scmp.eq.s32.totalorder %s19, 1
      %p215 = por %p213, %p214
      %p216 = scmp.ne.s32.totalorder %s205, %s206
      %p217 = scmp.eq.s32.totalorder %s19, 0
      %p218 = por %p216, %p217
      %p219 = scmp.ne.s32.totalorder %s205, %s206
      %p220 = scmp.eq.s32.totalorder %s20, 1
      %p221 = por %p219, %p220
      %p223 = scmp.ne.s32.totalorder %s206, %s222
      %p224 = scmp.eq.s32.totalorder %s20, 0
      %p225 = por %p223, %p224
      %p226 = scmp.le.s32.totalorder 1, %s14
      %p227 = scmp.lt.s32.totalorder %s14, 3
      %p228 = pnand %p226, %p227
      %p229 = pneg %p228
      // Predicated region
      $region9: #{decoder_forward.1} parent=5 // pred_check
        _
      $region10: #{decoder_forward.1} parent=5 // pred_check_branch
        %231 = sbr.rel (%p228) target = $region12
      $region11: #{decoder_forward.1} parent=5 // pred_region
        %s232 = ssub.s32 %s14, 1
        // Predicated region
        $region13: #{decoder_forward.1} parent=11 // pred_check
          %p233 = pneg %p87
        $region14: #{decoder_forward.1} parent=11 // pred_check_branch
          %235 = sbr.rel (%p233) target = $region16
        $region15: #{decoder_forward.1} parent=11 // pred_region
          _
        $region16: #{decoder_forward.1} parent=11 // pred_fallthru
          _
        // Predicated region
        $region17: #{decoder_forward.1} parent=11 // pred_check
          %p236 = pneg %p108
        $region18: #{decoder_forward.1} parent=11 // pred_check_branch
          %238 = sbr.rel (%p236) target = $region20
        $region19: #{decoder_forward.1} parent=11 // pred_region
          _
        $region20: #{decoder_forward.1} parent=11 // pred_fallthru
          _
        // Predicated region
        $region21: #{decoder_forward.1} parent=11 // pred_check
          %p239 = pneg %p129
        $region22: #{decoder_forward.1} parent=11 // pred_check_branch
          %241 = sbr.rel (%p239) target = $region24
        $region23: #{decoder_forward.1} parent=11 // pred_region
          _
        $region24: #{decoder_forward.1} parent=11 // pred_fallthru
          _
        // Predicated region
        $region25: #{decoder_forward.1} parent=11 // pred_check
          %p242 = pneg %p150
        $region26: #{decoder_forward.1} parent=11 // pred_check_branch
          %244 = sbr.rel (%p242) target = $region28
        $region27: #{decoder_forward.1} parent=11 // pred_region
          _
        $region28: #{decoder_forward.1} parent=11 // pred_fallthru
          _
        // Predicated region
        $region29: #{decoder_forward.1} parent=11 // pred_check
          %p245 = pneg %p171
        $region30: #{decoder_forward.1} parent=11 // pred_check_branch
          %247 = sbr.rel (%p245) target = $region32
        $region31: #{decoder_forward.1} parent=11 // pred_region
          _
        $region32: #{decoder_forward.1} parent=11 // pred_fallthru
          _
        // Predicated region
        $region33: #{decoder_forward.1} parent=11 // pred_check
          %p248 = pneg %p192
        $region34: #{decoder_forward.1} parent=11 // pred_check_branch
          %250 = sbr.rel (%p248) target = $region36
        $region35: #{decoder_forward.1} parent=11 // pred_region
          _
        $region36: #{decoder_forward.1} parent=11 // pred_fallthru
          _
      $region12: #{decoder_forward.1} parent=5 // pred_fallthru
        _
      %p251 = scmp.lt.s32.totalorder %s14, 2
      // Predicated region
      $region37: #{decoder_forward.1} parent=5 // pred_check
        %p252 = pneg %p251
      $region38: #{decoder_forward.1} parent=5 // pred_check_branch
        %254 = sbr.rel (%p252) target = $region40
      $region39: #{decoder_forward.1} parent=5 // pred_region
        // Predicated region
        $region41: #{decoder_forward.1} parent=39 // pred_check
          %p255 = pneg %p34
        $region42: #{decoder_forward.1} parent=39 // pred_check_branch
          %257 = sbr.rel (%p255) target = $region44
        $region43: #{decoder_forward.1} parent=39 // pred_region
          %s258 = smul.u32 32, %s14
          %s259 = ssub.s32 50, %s258
          %p260 = scmp.lt.s32.totalorder %s259, 32
          %s261 = scalar_select %p260, %s259, 32
          %s262 = smul.u32 128, %s261
          %p263 = scmp.lt.s32.totalorder %s258, 49
          %s264 = scalar_select %p263, %s258, 49
          %s265 = smul.addr %s264, 8
          %s266 = scalar_lea.vmem %s0, %s265
          %s267 = smul.u32 32, %s14
          %s268 = ssub.s32 50, %s267
          %p269 = scmp.lt.s32.totalorder %s268, 32
          %s270 = scalar_select %p269, %s268, 32
          %s271 = smul.u32 128, %s270
        $region44: #{decoder_forward.1} parent=39 // pred_fallthru
          _
        // Predicated region
        $region45: #{decoder_forward.1} parent=39 // pred_check
          %p272 = pneg %p60
        $region46: #{decoder_forward.1} parent=39 // pred_check_branch
          %274 = sbr.rel (%p272) target = $region48
        $region47: #{decoder_forward.1} parent=39 // pred_region
          %s275 = smul.u32 32, %s14
          %s276 = ssub.s32 50, %s275
          %p277 = scmp.lt.s32.totalorder %s276, 32
          %s278 = scalar_select %p277, %s276, 32
          %s279 = smul.u32 128, %s278
          %p280 = scmp.lt.s32.totalorder %s275, 49
          %s281 = scalar_select %p280, %s275, 49
          %s282 = smul.addr %s281, 8
          %s283 = scalar_lea.vmem %s1, %s282
          %s284 = smul.u32 32, %s14
          %s285 = ssub.s32 50, %s284
          %p286 = scmp.lt.s32.totalorder %s285, 32
          %s287 = scalar_select %p286, %s285, 32
          %s288 = smul.u32 128, %s287
        $region48: #{decoder_forward.1} parent=39 // pred_fallthru
          _
      $region40: #{decoder_forward.1} parent=5 // pred_fallthru
        _
      %p289 = scmp.le.s32.totalorder 1, %s14
      %p290 = scmp.lt.s32.totalorder %s14, 3
      %p291 = pnand %p289, %p290
      %p292 = pneg %p291
      // Predicated region
      $region49: #{decoder_forward.1} parent=5 // pred_check
        _
      $region50: #{decoder_forward.1} parent=5 // pred_check_branch
        %294 = sbr.rel (%p291) target = $region52
      $region51: #{decoder_forward.1} parent=5 // pred_region
        %s295 = ssub.s32 %s14, 1
        %s296 = smul.u32 32, %s19
        %s297 = ssub.s32 50, %s296
        %p298 = scmp.lt.s32.totalorder %s297, 32
        %s299 = scalar_select %p298, %s297, 32
        %s300 = smul.u32 128, %s299
        %p301 = scmp.lt.s32.totalorder %s296, 49
        %s302 = scalar_select %p301, %s296, 49
        %s303 = smul.addr %s302, 8
        %s304 = scalar_lea.vmem %s0, %s303
        %p305 = pneg %p40
        %p306 = pneg %p37
        %s307 = smul.u32 32, %s19
        %s308 = ssub.s32 50, %s307
        %p309 = scmp.lt.s32.totalorder %s308, 32
        %s310 = scalar_select %p309, %s308, 32
        %s311 = smul.u32 128, %s310
        %p312 = scmp.lt.s32.totalorder %s307, 49
        %s313 = scalar_select %p312, %s307, 49
        %s314 = smul.addr %s313, 8
        %s315 = scalar_lea.vmem %s1, %s314
        %p316 = pneg %p66
        %p317 = pneg %p63
        %p318 = pneg %p87
        %p319 = pneg %p84
        %p320 = pneg %p108
        %p321 = pneg %p105
        %p322 = pneg %p129
        %p323 = pneg %p126
        %p324 = pneg %p150
        %p325 = pneg %p147
        %p326 = pneg %p171
        %p327 = pneg %p168
        %p328 = pneg %p192
        %p329 = pneg %p189
        %p330 = pneg %p218
        %p331 = pneg %p215
        %s332 = sand.u32 %s205, 1
        %s333 = sand.u32 %s205, 1
        %s334 = smul.addr %s333, 256
        %s335 = scalar_lea.vmem [#allocation2], %s334
        %s336 = smul.u32 32, %s19
        %s337 = ssub.s32 50, %s336
        %p338 = scmp.lt.s32.totalorder %s337, 32
        %s339 = scalar_select %p338, %s337, 32
        %s340 = smul.u32 128, %s339
        %p341 = scmp.lt.s32.totalorder %s336, 49
        %s342 = scalar_select %p341, %s336, 49
        %s343 = smul.addr %s342, 8
        %s344 = scalar_lea.vmem %s0, %s343
        %s345 = smul.u32 32, %s19
        %s346 = ssub.s32 50, %s345
        %p347 = scmp.lt.s32.totalorder %s346, 32
        %s348 = scalar_select %p347, %s346, 32
        %s349 = smul.u32 128, %s348
        %s350 = smul.u32 32, %s19
        %s351 = ssub.s32 50, %s350
        %p352 = scmp.lt.s32.totalorder %s351, 32
        %s353 = scalar_select %p352, %s351, 32
        %s354 = smul.u32 128, %s353
        %p355 = scmp.lt.s32.totalorder %s350, 49
        %s356 = scalar_select %p355, %s350, 49
        %s357 = smul.addr %s356, 8
        %s358 = scalar_lea.vmem %s1, %s357
        %s359 = smul.u32 32, %s19
        %s360 = ssub.s32 50, %s359
        %p361 = scmp.lt.s32.totalorder %s360, 32
        %s362 = scalar_select %p361, %s360, 32
        %s363 = smul.u32 128, %s362
        %s364 = smul.u32 32, %s19
        %s365 = ssub.s32 50, %s364
        %p366 = scmp.lt.s32.totalorder %s365, 32
        %s367 = scalar_select %p366, %s365, 32
        %s368 = smul.u32 128, %s367
        %v370 = vld [vmem:[%s344] sm:$0xff]
        %v371 = vld [vmem:[%s344 + $0x8] sm:$0xff]
        %v372 = vld [vmem:[%s344 + $0x10] sm:$0xff]
        %v373 = vld [vmem:[%s344 + $0x18] sm:$0xff]
        %v374 = vld [vmem:[%s344 + $0x20] sm:$0xff]
        %v375 = vld [vmem:[%s344 + $0x28] sm:$0xff]
        %v376 = vld [vmem:[%s344 + $0x30] sm:$0xff]
        %v377 = vld [vmem:[%s344 + $0x38] sm:$0xff]
        %v378 = vld [vmem:[%s344 + $0x40] sm:$0xff]
        %v379 = vld [vmem:[%s344 + $0x48] sm:$0xff]
        %v380 = vld [vmem:[%s344 + $0x50] sm:$0xff]
        %v381 = vld [vmem:[%s344 + $0x58] sm:$0xff]
        %v382 = vld [vmem:[%s344 + $0x60] sm:$0xff]
        %v383 = vld [vmem:[%s344 + $0x68] sm:$0xff]
        %v384 = vld [vmem:[%s344 + $0x70] sm:$0xff]
        %v385 = vld [vmem:[%s344 + $0x78] sm:$0xff]
        %v386 = vld [vmem:[%s344 + $0x80] sm:$0xff]
        %v387 = vld [vmem:[%s344 + $0x88] sm:$0xff]
        %v388 = vld [vmem:[%s344 + $0x90] sm:$0xff]
        %v389 = vld [vmem:[%s344 + $0x98] sm:$0xff]
        %v390 = vld [vmem:[%s344 + $0xa0] sm:$0xff]
        %v391 = vld [vmem:[%s344 + $0xa8] sm:$0xff]
        %v392 = vld [vmem:[%s344 + $0xb0] sm:$0xff]
        %v393 = vld [vmem:[%s344 + $0xb8] sm:$0xff]
        %v394 = vld [vmem:[%s344 + $0xc0] sm:$0xff]
        %v395 = vld [vmem:[%s344 + $0xc8] sm:$0xff]
        %v396 = vld [vmem:[%s344 + $0xd0] sm:$0xff]
        %v397 = vld [vmem:[%s344 + $0xd8] sm:$0xff]
        %v398 = vld [vmem:[%s344 + $0xe0] sm:$0xff]
        %v399 = vld [vmem:[%s344 + $0xe8] sm:$0xff]
        %v400 = vld [vmem:[%s344 + $0xf0] sm:$0xff]
        %v401 = vld [vmem:[%s344 + $0xf8] sm:$0xff]
        %v402 = vpack.c.bf16 %v371, %v370
        %v403 = vpack.c.bf16 %v373, %v372
        %v404 = vpack.c.bf16 %v375, %v374
        %v405 = vpack.c.bf16 %v377, %v376
        %v406 = vpack.c.bf16 %v379, %v378
        %v407 = vpack.c.bf16 %v381, %v380
        %v408 = vpack.c.bf16 %v383, %v382
        %v409 = vpack.c.bf16 %v385, %v384
        %v410 = vpack.c.bf16 %v387, %v386
        %v411 = vpack.c.bf16 %v389, %v388
        %v412 = vpack.c.bf16 %v391, %v390
        %v413 = vpack.c.bf16 %v393, %v392
        %v414 = vpack.c.bf16 %v395, %v394
        %v415 = vpack.c.bf16 %v397, %v396
        %v416 = vpack.c.bf16 %v399, %v398
        %v417 = vpack.c.bf16 %v401, %v400
        %v418 = vld [vmem:[%s2] sm:$0xf]
        %v419 = vld [vmem:[%s2 + $0x4] sm:$0xf]
        %v420 = vld [vmem:[%s2 + $0x8] sm:$0xf]
        %v421 = vld [vmem:[%s2 + $0xc] sm:$0xf]
        %v422 = vld [vmem:[%s2 + $0x10] sm:$0xf]
        %v423 = vld [vmem:[%s2 + $0x14] sm:$0xf]
        %v424 = vld [vmem:[%s2 + $0x18] sm:$0xf]
        %v425 = vld [vmem:[%s2 + $0x1c] sm:$0xf]
        %v426 = vld [vmem:[%s2 + $0x20] sm:$0xf]
        %v427 = vld [vmem:[%s2 + $0x24] sm:$0xf]
        %v428 = vld [vmem:[%s2 + $0x28] sm:$0xf]
        %v429 = vld [vmem:[%s2 + $0x2c] sm:$0xf]
        %v430 = vld [vmem:[%s2 + $0x30] sm:$0xf]
        %v431 = vld [vmem:[%s2 + $0x34] sm:$0xf]
        %v432 = vld [vmem:[%s2 + $0x38] sm:$0xf]
        %v433 = vld [vmem:[%s2 + $0x3c] sm:$0xf]
        %v434 = vld [vmem:[%s3] sm:$0x1]
        %v436 = vlaneseq
        %v437 = vshrl.u32 %v436, 7
        %v438 = vsub.s32 0, %v437
        %v439 = vrot.slane %v434, %v438
        %v457 = vunpack.c.l.b16 %v418
        %v458 = vunpack.c.l.b16 %v419
        %v459 = vunpack.c.l.b16 %v420
        %v460 = vunpack.c.l.b16 %v421
        %v461 = vunpack.c.l.b16 %v422
        %v462 = vunpack.c.l.b16 %v423
        %v463 = vunpack.c.l.b16 %v424
        %v464 = vunpack.c.l.b16 %v425
        %v465 = vunpack.c.l.b16 %v426
        %v466 = vunpack.c.l.b16 %v427
        %v467 = vunpack.c.l.b16 %v428
        %v468 = vunpack.c.l.b16 %v429
        %v469 = vunpack.c.l.b16 %v430
        %v470 = vunpack.c.l.b16 %v431
        %v471 = vunpack.c.l.b16 %v432
        %v472 = vunpack.c.l.b16 %v433
        %v473 = vpack.c.b16 %v458, %v457
        %v474 = vpack.c.b16 %v460, %v459
        %v475 = vpack.c.b16 %v462, %v461
        %v476 = vpack.c.b16 %v464, %v463
        %v477 = vpack.c.b16 %v466, %v465
        %v478 = vpack.c.b16 %v468, %v467
        %v479 = vpack.c.b16 %v470, %v469
        %v480 = vpack.c.b16 %v472, %v471
        %489 = vmatprep.subr.bf16.mxu0 0
        %490 = vmatpush1.bf16.msra.mxu0 %v480
        %491 = vmatprep.subr.bf16.mxu0 0
        %492 = vmatpush1.bf16.msra.mxu0 %v479
        %493 = vmatprep.subr.bf16.mxu0 0
        %494 = vmatpush1.bf16.msra.mxu0 %v478
        %495 = vmatprep.subr.bf16.mxu0 0
        %496 = vmatpush1.bf16.msra.mxu0 %v477
        %497 = vmatprep.subr.bf16.mxu0 0
        %498 = vmatpush1.bf16.msra.mxu0 %v476
        %499 = vmatprep.subr.bf16.mxu0 0
        %500 = vmatpush1.bf16.msra.mxu0 %v475
        %501 = vmatprep.subr.bf16.mxu0 0
        %502 = vmatpush1.bf16.msra.mxu0 %v474
        %503 = vmatprep.subr.bf16.mxu0 0
        %504 = vmatpush1.bf16.msra.mxu0 %v473
        %505 = vmatprep.subr.bf16.mxu0 0
        %506 = vmatpush2.bf16.msra.mxu0 0
        %507 = vmatprep.subr.bf16.mxu0 0
        %508 = vmatpush2.bf16.msra.mxu0 0
        %509 = vmatprep.subr.bf16.mxu0 0
        %510 = vmatpush2.bf16.msra.mxu0 0
        %511 = vmatprep.subr.bf16.mxu0 0
        %512 = vmatpush2.bf16.msra.mxu0 0
        %513 = vmatprep.subr.bf16.mxu0 0
        %514 = vmatpush2.bf16.msra.mxu0 0
        %515 = vmatprep.subr.bf16.mxu0 0
        %516 = vmatpush2.bf16.msra.mxu0 0
        %517 = vmatprep.subr.bf16.mxu0 0
        %518 = vmatpush2.bf16.msra.mxu0 0
        %519 = vmatprep.subr.bf16.mxu0 0
        %520 = vmatpush2.bf16.msra.mxu0 0
        %521 = vmatprep.mubr.bf16.mxu0 0
        %522 = vmatmul.mubr.bf16.gmra.mxu0 %v402
        %v523 = vpop.f32.mrf.mxu0
        %v524 = vadd.f32 %v439, %v523
        %v525 = vpop.f32.mrf.mxu0
        %v526 = vpop.f32.mrf.mxu0
        %v527 = vadd.f32 %v439, %v526
        %v528 = vpop.f32.mrf.mxu0
        %529 = vmatprep.mubr.bf16.mxu0 0
        %530 = vmatmul.mubr.bf16.gmra.mxu0 %v403
        %v531 = vpop.f32.mrf.mxu0
        %v532 = vadd.f32 %v439, %v531
        %v533 = vpop.f32.mrf.mxu0
        %v534 = vpop.f32.mrf.mxu0
        %v535 = vadd.f32 %v439, %v534
        %v536 = vpop.f32.mrf.mxu0
        %537 = vmatprep.mubr.bf16.mxu0 0
        %538 = vmatmul.mubr.bf16.gmra.mxu0 %v404
        %v539 = vpop.f32.mrf.mxu0
        %v540 = vadd.f32 %v439, %v539
        %v541 = vpop.f32.mrf.mxu0
        %v542 = vpop.f32.mrf.mxu0
        %v543 = vadd.f32 %v439, %v542
        %v544 = vpop.f32.mrf.mxu0
        %545 = vmatprep.mubr.bf16.mxu0 0
        %546 = vmatmul.mubr.bf16.gmra.mxu0 %v405
        %v547 = vpop.f32.mrf.mxu0
        %v548 = vadd.f32 %v439, %v547
        %v549 = vpop.f32.mrf.mxu0
        %v550 = vpop.f32.mrf.mxu0
        %v551 = vadd.f32 %v439, %v550
        %v552 = vpop.f32.mrf.mxu0
        %553 = vmatprep.mubr.bf16.mxu0 0
        %554 = vmatmul.mubr.bf16.gmra.mxu0 %v406
        %v555 = vpop.f32.mrf.mxu0
        %v556 = vadd.f32 %v439, %v555
        %v557 = vpop.f32.mrf.mxu0
        %v558 = vpop.f32.mrf.mxu0
        %v559 = vadd.f32 %v439, %v558
        %v560 = vpop.f32.mrf.mxu0
        %561 = vmatprep.mubr.bf16.mxu0 0
        %562 = vmatmul.mubr.bf16.gmra.mxu0 %v407
        %v563 = vpop.f32.mrf.mxu0
        %v564 = vadd.f32 %v439, %v563
        %v565 = vpop.f32.mrf.mxu0
        %v566 = vpop.f32.mrf.mxu0
        %v567 = vadd.f32 %v439, %v566
        %v568 = vpop.f32.mrf.mxu0
        %569 = vmatprep.mubr.bf16.mxu0 0
        %570 = vmatmul.mubr.bf16.gmra.mxu0 %v408
        %v571 = vpop.f32.mrf.mxu0
        %v572 = vadd.f32 %v439, %v571
        %v573 = vpop.f32.mrf.mxu0
        %v574 = vpop.f32.mrf.mxu0
        %v575 = vadd.f32 %v439, %v574
        %v576 = vpop.f32.mrf.mxu0
        %577 = vmatprep.mubr.bf16.mxu0 0
        %578 = vmatmul.mubr.bf16.gmra.mxu0 %v409
        %v579 = vpop.f32.mrf.mxu0
        %v580 = vadd.f32 %v439, %v579
        %v581 = vpop.f32.mrf.mxu0
        %v582 = vpop.f32.mrf.mxu0
        %v583 = vadd.f32 %v439, %v582
        %v584 = vpop.f32.mrf.mxu0
        %585 = vmatprep.mubr.bf16.mxu0 0
        %586 = vmatmul.mubr.bf16.gmra.mxu0 %v410
        %v587 = vpop.f32.mrf.mxu0
        %v588 = vadd.f32 %v439, %v587
        %v589 = vpop.f32.mrf.mxu0
        %v590 = vpop.f32.mrf.mxu0
        %v591 = vadd.f32 %v439, %v590
        %v592 = vpop.f32.mrf.mxu0
        %593 = vmatprep.mubr.bf16.mxu0 0
        %594 = vmatmul.mubr.bf16.gmra.mxu0 %v411
        %v595 = vpop.f32.mrf.mxu0
        %v596 = vadd.f32 %v439, %v595
        %v597 = vpop.f32.mrf.mxu0
        %v598 = vpop.f32.mrf.mxu0
        %v599 = vadd.f32 %v439, %v598
        %v600 = vpop.f32.mrf.mxu0
        %601 = vmatprep.mubr.bf16.mxu0 0
        %602 = vmatmul.mubr.bf16.gmra.mxu0 %v412
        %v603 = vpop.f32.mrf.mxu0
        %v604 = vadd.f32 %v439, %v603
        %v605 = vpop.f32.mrf.mxu0
        %v606 = vpop.f32.mrf.mxu0
        %v607 = vadd.f32 %v439, %v606
        %v608 = vpop.f32.mrf.mxu0
        %609 = vmatprep.mubr.bf16.mxu0 0
        %610 = vmatmul.mubr.bf16.gmra.mxu0 %v413
        %v611 = vpop.f32.mrf.mxu0
        %v612 = vadd.f32 %v439, %v611
        %v613 = vpop.f32.mrf.mxu0
        %v614 = vpop.f32.mrf.mxu0
        %v615 = vadd.f32 %v439, %v614
        %v616 = vpop.f32.mrf.mxu0
        %617 = vmatprep.mubr.bf16.mxu0 0
        %618 = vmatmul.mubr.bf16.gmra.mxu0 %v414
        %v619 = vpop.f32.mrf.mxu0
        %v620 = vadd.f32 %v439, %v619
        %v621 = vpop.f32.mrf.mxu0
        %v622 = vpop.f32.mrf.mxu0
        %v623 = vadd.f32 %v439, %v622
        %v624 = vpop.f32.mrf.mxu0
        %625 = vmatprep.mubr.bf16.mxu0 0
        %626 = vmatmul.mubr.bf16.gmra.mxu0 %v415
        %v627 = vpop.f32.mrf.mxu0
        %v628 = vadd.f32 %v439, %v627
        %v629 = vpop.f32.mrf.mxu0
        %v630 = vpop.f32.mrf.mxu0
        %v631 = vadd.f32 %v439, %v630
        %v632 = vpop.f32.mrf.mxu0
        %633 = vmatprep.mubr.bf16.mxu0 0
        %634 = vmatmul.mubr.bf16.gmra.mxu0 %v416
        %v635 = vpop.f32.mrf.mxu0
        %v636 = vadd.f32 %v439, %v635
        %v637 = vpop.f32.mrf.mxu0
        %v638 = vpop.f32.mrf.mxu0
        %v639 = vadd.f32 %v439, %v638
        %v640 = vpop.f32.mrf.mxu0
        %641 = vmatprep.mubr.bf16.mxu0 0
        %642 = vmatmul.mubr.bf16.gmra.mxu0 %v417
        %v643 = vpop.f32.mrf.mxu0
        %v644 = vadd.f32 %v439, %v643
        %v645 = vpop.f32.mrf.mxu0
        %v646 = vpop.f32.mrf.mxu0
        %v647 = vadd.f32 %v439, %v646
        %v648 = vpop.f32.mrf.mxu0
        %649 = vdwg.mxu0
        %v650 = vmax.f32 %v524, 0.0
        %v651 = vmax.f32 %v527, 0.0
        %v652 = vmax.f32 %v532, 0.0
        %v653 = vmax.f32 %v535, 0.0
        %v654 = vmax.f32 %v540, 0.0
        %v655 = vmax.f32 %v543, 0.0
        %v656 = vmax.f32 %v548, 0.0
        %v657 = vmax.f32 %v551, 0.0
        %v658 = vmax.f32 %v556, 0.0
        %v659 = vmax.f32 %v559, 0.0
        %v660 = vmax.f32 %v564, 0.0
        %v661 = vmax.f32 %v567, 0.0
        %v662 = vmax.f32 %v572, 0.0
        %v663 = vmax.f32 %v575, 0.0
        %v664 = vmax.f32 %v580, 0.0
        %v665 = vmax.f32 %v583, 0.0
        %v666 = vmax.f32 %v588, 0.0
        %v667 = vmax.f32 %v591, 0.0
        %v668 = vmax.f32 %v596, 0.0
        %v669 = vmax.f32 %v599, 0.0
        %v670 = vmax.f32 %v604, 0.0
        %v671 = vmax.f32 %v607, 0.0
        %v672 = vmax.f32 %v612, 0.0
        %v673 = vmax.f32 %v615, 0.0
        %v674 = vmax.f32 %v620, 0.0
        %v675 = vmax.f32 %v623, 0.0
        %v676 = vmax.f32 %v628, 0.0
        %v677 = vmax.f32 %v631, 0.0
        %v678 = vmax.f32 %v636, 0.0
        %v679 = vmax.f32 %v639, 0.0
        %v680 = vmax.f32 %v644, 0.0
        %v681 = vmax.f32 %v647, 0.0
        %v682 = vpack.c.bf16 %v651, %v650
        %v683 = vpack.c.bf16 %v653, %v652
        %v684 = vpack.c.bf16 %v655, %v654
        %v685 = vpack.c.bf16 %v657, %v656
        %v686 = vpack.c.bf16 %v659, %v658
        %v687 = vpack.c.bf16 %v661, %v660
        %v688 = vpack.c.bf16 %v663, %v662
        %v689 = vpack.c.bf16 %v665, %v664
        %v690 = vpack.c.bf16 %v667, %v666
        %v691 = vpack.c.bf16 %v669, %v668
        %v692 = vpack.c.bf16 %v671, %v670
        %v693 = vpack.c.bf16 %v673, %v672
        %v694 = vpack.c.bf16 %v675, %v674
        %v695 = vpack.c.bf16 %v677, %v676
        %v696 = vpack.c.bf16 %v679, %v678
        %v697 = vpack.c.bf16 %v681, %v680
        %v698 = vld [vmem:[%s4] sm:$0xf]
        %v699 = vld [vmem:[%s4 + $0x4] sm:$0xf]
        %v700 = vld [vmem:[%s4 + $0x8] sm:$0xf]
        %v701 = vld [vmem:[%s4 + $0xc] sm:$0xf]
        %v702 = vld [vmem:[%s4 + $0x10] sm:$0xf]
        %v703 = vld [vmem:[%s4 + $0x14] sm:$0xf]
        %v704 = vld [vmem:[%s4 + $0x18] sm:$0xf]
        %v705 = vld [vmem:[%s4 + $0x1c] sm:$0xf]
        %v706 = vld [vmem:[%s4 + $0x20] sm:$0xf]
        %v707 = vld [vmem:[%s4 + $0x24] sm:$0xf]
        %v708 = vld [vmem:[%s4 + $0x28] sm:$0xf]
        %v709 = vld [vmem:[%s4 + $0x2c] sm:$0xf]
        %v710 = vld [vmem:[%s4 + $0x30] sm:$0xf]
        %v711 = vld [vmem:[%s4 + $0x34] sm:$0xf]
        %v712 = vld [vmem:[%s4 + $0x38] sm:$0xf]
        %v713 = vld [vmem:[%s4 + $0x3c] sm:$0xf]
        %v714 = vld [vmem:[%s5] sm:$0x1]
        %v716 = vlaneseq
        %v717 = vshrl.u32 %v716, 7
        %v718 = vsub.s32 0, %v717
        %v719 = vrot.slane %v714, %v718
        %v737 = vunpack.c.l.b16 %v698
        %v738 = vunpack.c.l.b16 %v699
        %v739 = vunpack.c.l.b16 %v700
        %v740 = vunpack.c.l.b16 %v701
        %v741 = vunpack.c.l.b16 %v702
        %v742 = vunpack.c.l.b16 %v703
        %v743 = vunpack.c.l.b16 %v704
        %v744 = vunpack.c.l.b16 %v705
        %v745 = vunpack.c.l.b16 %v706
        %v746 = vunpack.c.l.b16 %v707
        %v747 = vunpack.c.l.b16 %v708
        %v748 = vunpack.c.l.b16 %v709
        %v749 = vunpack.c.l.b16 %v710
        %v750 = vunpack.c.l.b16 %v711
        %v751 = vunpack.c.l.b16 %v712
        %v752 = vunpack.c.l.b16 %v713
        %v753 = vpack.c.b16 %v738, %v737
        %v754 = vpack.c.b16 %v740, %v739
        %v755 = vpack.c.b16 %v742, %v741
        %v756 = vpack.c.b16 %v744, %v743
        %v757 = vpack.c.b16 %v746, %v745
        %v758 = vpack.c.b16 %v748, %v747
        %v759 = vpack.c.b16 %v750, %v749
        %v760 = vpack.c.b16 %v752, %v751
        %769 = vmatprep.subr.bf16.mxu0 0
        %770 = vmatpush1.bf16.msra.mxu0 %v760
        %771 = vmatprep.subr.bf16.mxu0 0
        %772 = vmatpush1.bf16.msra.mxu0 %v759
        %773 = vmatprep.subr.bf16.mxu0 0
        %774 = vmatpush1.bf16.msra.mxu0 %v758
        %775 = vmatprep.subr.bf16.mxu0 0
        %776 = vmatpush1.bf16.msra.mxu0 %v757
        %777 = vmatprep.subr.bf16.mxu0 0
        %778 = vmatpush1.bf16.msra.mxu0 %v756
        %779 = vmatprep.subr.bf16.mxu0 0
        %780 = vmatpush1.bf16.msra.mxu0 %v755
        %781 = vmatprep.subr.bf16.mxu0 0
        %782 = vmatpush1.bf16.msra.mxu0 %v754
        %783 = vmatprep.subr.bf16.mxu0 0
        %784 = vmatpush1.bf16.msra.mxu0 %v753
        %785 = vmatprep.subr.bf16.mxu0 0
        %786 = vmatpush2.bf16.msra.mxu0 0
        %787 = vmatprep.subr.bf16.mxu0 0
        %788 = vmatpush2.bf16.msra.mxu0 0
        %789 = vmatprep.subr.bf16.mxu0 0
        %790 = vmatpush2.bf16.msra.mxu0 0
        %791 = vmatprep.subr.bf16.mxu0 0
        %792 = vmatpush2.bf16.msra.mxu0 0
        %793 = vmatprep.subr.bf16.mxu0 0
        %794 = vmatpush2.bf16.msra.mxu0 0
        %795 = vmatprep.subr.bf16.mxu0 0
        %796 = vmatpush2.bf16.msra.mxu0 0
        %797 = vmatprep.subr.bf16.mxu0 0
        %798 = vmatpush2.bf16.msra.mxu0 0
        %799 = vmatprep.subr.bf16.mxu0 0
        %800 = vmatpush2.bf16.msra.mxu0 0
        %801 = vmatprep.mubr.bf16.mxu0 0
        %802 = vmatmul.mubr.bf16.gmra.mxu0 %v682
        %v803 = vpop.f32.mrf.mxu0
        %v804 = vadd.f32 %v719, %v803
        %v805 = vpop.f32.mrf.mxu0
        %v806 = vpop.f32.mrf.mxu0
        %v807 = vadd.f32 %v719, %v806
        %v808 = vpop.f32.mrf.mxu0
        %809 = vmatprep.mubr.bf16.mxu0 0
        %810 = vmatmul.mubr.bf16.gmra.mxu0 %v683
        %v811 = vpop.f32.mrf.mxu0
        %v812 = vadd.f32 %v719, %v811
        %v813 = vpop.f32.mrf.mxu0
        %v814 = vpop.f32.mrf.mxu0
        %v815 = vadd.f32 %v719, %v814
        %v816 = vpop.f32.mrf.mxu0
        %817 = vmatprep.mubr.bf16.mxu0 0
        %818 = vmatmul.mubr.bf16.gmra.mxu0 %v684
        %v819 = vpop.f32.mrf.mxu0
        %v820 = vadd.f32 %v719, %v819
        %v821 = vpop.f32.mrf.mxu0
        %v822 = vpop.f32.mrf.mxu0
        %v823 = vadd.f32 %v719, %v822
        %v824 = vpop.f32.mrf.mxu0
        %825 = vmatprep.mubr.bf16.mxu0 0
        %826 = vmatmul.mubr.bf16.gmra.mxu0 %v685
        %v827 = vpop.f32.mrf.mxu0
        %v828 = vadd.f32 %v719, %v827
        %v829 = vpop.f32.mrf.mxu0
        %v830 = vpop.f32.mrf.mxu0
        %v831 = vadd.f32 %v719, %v830
        %v832 = vpop.f32.mrf.mxu0
        %833 = vmatprep.mubr.bf16.mxu0 0
        %834 = vmatmul.mubr.bf16.gmra.mxu0 %v686
        %v835 = vpop.f32.mrf.mxu0
        %v836 = vadd.f32 %v719, %v835
        %v837 = vpop.f32.mrf.mxu0
        %v838 = vpop.f32.mrf.mxu0
        %v839 = vadd.f32 %v719, %v838
        %v840 = vpop.f32.mrf.mxu0
        %841 = vmatprep.mubr.bf16.mxu0 0
        %842 = vmatmul.mubr.bf16.gmra.mxu0 %v687
        %v843 = vpop.f32.mrf.mxu0
        %v844 = vadd.f32 %v719, %v843
        %v845 = vpop.f32.mrf.mxu0
        %v846 = vpop.f32.mrf.mxu0
        %v847 = vadd.f32 %v719, %v846
        %v848 = vpop.f32.mrf.mxu0
        %849 = vmatprep.mubr.bf16.mxu0 0
        %850 = vmatmul.mubr.bf16.gmra.mxu0 %v688
        %v851 = vpop.f32.mrf.mxu0
        %v852 = vadd.f32 %v719, %v851
        %v853 = vpop.f32.mrf.mxu0
        %v854 = vpop.f32.mrf.mxu0
        %v855 = vadd.f32 %v719, %v854
        %v856 = vpop.f32.mrf.mxu0
        %857 = vmatprep.mubr.bf16.mxu0 0
        %858 = vmatmul.mubr.bf16.gmra.mxu0 %v689
        %v859 = vpop.f32.mrf.mxu0
        %v860 = vadd.f32 %v719, %v859
        %v861 = vpop.f32.mrf.mxu0
        %v862 = vpop.f32.mrf.mxu0
        %v863 = vadd.f32 %v719, %v862
        %v864 = vpop.f32.mrf.mxu0
        %865 = vmatprep.mubr.bf16.mxu0 0
        %866 = vmatmul.mubr.bf16.gmra.mxu0 %v690
        %v867 = vpop.f32.mrf.mxu0
        %v868 = vadd.f32 %v719, %v867
        %v869 = vpop.f32.mrf.mxu0
        %v870 = vpop.f32.mrf.mxu0
        %v871 = vadd.f32 %v719, %v870
        %v872 = vpop.f32.mrf.mxu0
        %873 = vmatprep.mubr.bf16.mxu0 0
        %874 = vmatmul.mubr.bf16.gmra.mxu0 %v691
        %v875 = vpop.f32.mrf.mxu0
        %v876 = vadd.f32 %v719, %v875
        %v877 = vpop.f32.mrf.mxu0
        %v878 = vpop.f32.mrf.mxu0
        %v879 = vadd.f32 %v719, %v878
        %v880 = vpop.f32.mrf.mxu0
        %881 = vmatprep.mubr.bf16.mxu0 0
        %882 = vmatmul.mubr.bf16.gmra.mxu0 %v692
        %v883 = vpop.f32.mrf.mxu0
        %v884 = vadd.f32 %v719, %v883
        %v885 = vpop.f32.mrf.mxu0
        %v886 = vpop.f32.mrf.mxu0
        %v887 = vadd.f32 %v719, %v886
        %v888 = vpop.f32.mrf.mxu0
        %889 = vmatprep.mubr.bf16.mxu0 0
        %890 = vmatmul.mubr.bf16.gmra.mxu0 %v693
        %v891 = vpop.f32.mrf.mxu0
        %v892 = vadd.f32 %v719, %v891
        %v893 = vpop.f32.mrf.mxu0
        %v894 = vpop.f32.mrf.mxu0
        %v895 = vadd.f32 %v719, %v894
        %v896 = vpop.f32.mrf.mxu0
        %897 = vmatprep.mubr.bf16.mxu0 0
        %898 = vmatmul.mubr.bf16.gmra.mxu0 %v694
        %v899 = vpop.f32.mrf.mxu0
        %v900 = vadd.f32 %v719, %v899
        %v901 = vpop.f32.mrf.mxu0
        %v902 = vpop.f32.mrf.mxu0
        %v903 = vadd.f32 %v719, %v902
        %v904 = vpop.f32.mrf.mxu0
        %905 = vmatprep.mubr.bf16.mxu0 0
        %906 = vmatmul.mubr.bf16.gmra.mxu0 %v695
        %v907 = vpop.f32.mrf.mxu0
        %v908 = vadd.f32 %v719, %v907
        %v909 = vpop.f32.mrf.mxu0
        %v910 = vpop.f32.mrf.mxu0
        %v911 = vadd.f32 %v719, %v910
        %v912 = vpop.f32.mrf.mxu0
        %913 = vmatprep.mubr.bf16.mxu0 0
        %914 = vmatmul.mubr.bf16.gmra.mxu0 %v696
        %v915 = vpop.f32.mrf.mxu0
        %v916 = vadd.f32 %v719, %v915
        %v917 = vpop.f32.mrf.mxu0
        %v918 = vpop.f32.mrf.mxu0
        %v919 = vadd.f32 %v719, %v918
        %v920 = vpop.f32.mrf.mxu0
        %921 = vmatprep.mubr.bf16.mxu0 0
        %922 = vmatmul.mubr.bf16.gmra.mxu0 %v697
        %v923 = vpop.f32.mrf.mxu0
        %v924 = vadd.f32 %v719, %v923
        %v925 = vpop.f32.mrf.mxu0
        %v926 = vpop.f32.mrf.mxu0
        %v927 = vadd.f32 %v719, %v926
        %v928 = vpop.f32.mrf.mxu0
        %929 = vdwg.mxu0
        %v930 = vmax.f32 %v804, 0.0
        %v931 = vmax.f32 %v807, 0.0
        %v932 = vmax.f32 %v812, 0.0
        %v933 = vmax.f32 %v815, 0.0
        %v934 = vmax.f32 %v820, 0.0
        %v935 = vmax.f32 %v823, 0.0
        %v936 = vmax.f32 %v828, 0.0
        %v937 = vmax.f32 %v831, 0.0
        %v938 = vmax.f32 %v836, 0.0
        %v939 = vmax.f32 %v839, 0.0
        %v940 = vmax.f32 %v844, 0.0
        %v941 = vmax.f32 %v847, 0.0
        %v942 = vmax.f32 %v852, 0.0
        %v943 = vmax.f32 %v855, 0.0
        %v944 = vmax.f32 %v860, 0.0
        %v945 = vmax.f32 %v863, 0.0
        %v946 = vmax.f32 %v868, 0.0
        %v947 = vmax.f32 %v871, 0.0
        %v948 = vmax.f32 %v876, 0.0
        %v949 = vmax.f32 %v879, 0.0
        %v950 = vmax.f32 %v884, 0.0
        %v951 = vmax.f32 %v887, 0.0
        %v952 = vmax.f32 %v892, 0.0
        %v953 = vmax.f32 %v895, 0.0
        %v954 = vmax.f32 %v900, 0.0
        %v955 = vmax.f32 %v903, 0.0
        %v956 = vmax.f32 %v908, 0.0
        %v957 = vmax.f32 %v911, 0.0
        %v958 = vmax.f32 %v916, 0.0
        %v959 = vmax.f32 %v919, 0.0
        %v960 = vmax.f32 %v924, 0.0
        %v961 = vmax.f32 %v927, 0.0
        %v962 = vpack.c.bf16 %v931, %v930
        %v963 = vpack.c.bf16 %v933, %v932
        %v964 = vpack.c.bf16 %v935, %v934
        %v965 = vpack.c.bf16 %v937, %v936
        %v966 = vpack.c.bf16 %v939, %v938
        %v967 = vpack.c.bf16 %v941, %v940
        %v968 = vpack.c.bf16 %v943, %v942
        %v969 = vpack.c.bf16 %v945, %v944
        %v970 = vpack.c.bf16 %v947, %v946
        %v971 = vpack.c.bf16 %v949, %v948
        %v972 = vpack.c.bf16 %v951, %v950
        %v973 = vpack.c.bf16 %v953, %v952
        %v974 = vpack.c.bf16 %v955, %v954
        %v975 = vpack.c.bf16 %v957, %v956
        %v976 = vpack.c.bf16 %v959, %v958
        %v977 = vpack.c.bf16 %v961, %v960
        %v978 = vld [vmem:[%s6] sm:$0xf]
        %v979 = vld [vmem:[%s6 + $0x4] sm:$0xf]
        %v980 = vld [vmem:[%s6 + $0x8] sm:$0xf]
        %v981 = vld [vmem:[%s6 + $0xc] sm:$0xf]
        %v982 = vld [vmem:[%s6 + $0x10] sm:$0xf]
        %v983 = vld [vmem:[%s6 + $0x14] sm:$0xf]
        %v984 = vld [vmem:[%s6 + $0x18] sm:$0xf]
        %v985 = vld [vmem:[%s6 + $0x1c] sm:$0xf]
        %v986 = vld [vmem:[%s6 + $0x20] sm:$0xf]
        %v987 = vld [vmem:[%s6 + $0x24] sm:$0xf]
        %v988 = vld [vmem:[%s6 + $0x28] sm:$0xf]
        %v989 = vld [vmem:[%s6 + $0x2c] sm:$0xf]
        %v990 = vld [vmem:[%s6 + $0x30] sm:$0xf]
        %v991 = vld [vmem:[%s6 + $0x34] sm:$0xf]
        %v992 = vld [vmem:[%s6 + $0x38] sm:$0xf]
        %v993 = vld [vmem:[%s6 + $0x3c] sm:$0xf]
        %v994 = vld [vmem:[%s7] sm:$0x1]
        %v996 = vlaneseq
        %v997 = vshrl.u32 %v996, 7
        %v998 = vsub.s32 0, %v997
        %v999 = vrot.slane %v994, %v998
        %v1017 = vunpack.c.l.b16 %v978
        %v1018 = vunpack.c.l.b16 %v979
        %v1019 = vunpack.c.l.b16 %v980
        %v1020 = vunpack.c.l.b16 %v981
        %v1021 = vunpack.c.l.b16 %v982
        %v1022 = vunpack.c.l.b16 %v983
        %v1023 = vunpack.c.l.b16 %v984
        %v1024 = vunpack.c.l.b16 %v985
        %v1025 = vunpack.c.l.b16 %v986
        %v1026 = vunpack.c.l.b16 %v987
        %v1027 = vunpack.c.l.b16 %v988
        %v1028 = vunpack.c.l.b16 %v989
        %v1029 = vunpack.c.l.b16 %v990
        %v1030 = vunpack.c.l.b16 %v991
        %v1031 = vunpack.c.l.b16 %v992
        %v1032 = vunpack.c.l.b16 %v993
        %v1033 = vpack.c.b16 %v1018, %v1017
        %v1034 = vpack.c.b16 %v1020, %v1019
        %v1035 = vpack.c.b16 %v1022, %v1021
        %v1036 = vpack.c.b16 %v1024, %v1023
        %v1037 = vpack.c.b16 %v1026, %v1025
        %v1038 = vpack.c.b16 %v1028, %v1027
        %v1039 = vpack.c.b16 %v1030, %v1029
        %v1040 = vpack.c.b16 %v1032, %v1031
        %1049 = vmatprep.subr.bf16.mxu0 0
        %1050 = vmatpush1.bf16.msra.mxu0 %v1040
        %1051 = vmatprep.subr.bf16.mxu0 0
        %1052 = vmatpush1.bf16.msra.mxu0 %v1039
        %1053 = vmatprep.subr.bf16.mxu0 0
        %1054 = vmatpush1.bf16.msra.mxu0 %v1038
        %1055 = vmatprep.subr.bf16.mxu0 0
        %1056 = vmatpush1.bf16.msra.mxu0 %v1037
        %1057 = vmatprep.subr.bf16.mxu0 0
        %1058 = vmatpush1.bf16.msra.mxu0 %v1036
        %1059 = vmatprep.subr.bf16.mxu0 0
        %1060 = vmatpush1.bf16.msra.mxu0 %v1035
        %1061 = vmatprep.subr.bf16.mxu0 0
        %1062 = vmatpush1.bf16.msra.mxu0 %v1034
        %1063 = vmatprep.subr.bf16.mxu0 0
        %1064 = vmatpush1.bf16.msra.mxu0 %v1033
        %1065 = vmatprep.subr.bf16.mxu0 0
        %1066 = vmatpush2.bf16.msra.mxu0 0
        %1067 = vmatprep.subr.bf16.mxu0 0
        %1068 = vmatpush2.bf16.msra.mxu0 0
        %1069 = vmatprep.subr.bf16.mxu0 0
        %1070 = vmatpush2.bf16.msra.mxu0 0
        %1071 = vmatprep.subr.bf16.mxu0 0
        %1072 = vmatpush2.bf16.msra.mxu0 0
        %1073 = vmatprep.subr.bf16.mxu0 0
        %1074 = vmatpush2.bf16.msra.mxu0 0
        %1075 = vmatprep.subr.bf16.mxu0 0
        %1076 = vmatpush2.bf16.msra.mxu0 0
        %1077 = vmatprep.subr.bf16.mxu0 0
        %1078 = vmatpush2.bf16.msra.mxu0 0
        %1079 = vmatprep.subr.bf16.mxu0 0
        %1080 = vmatpush2.bf16.msra.mxu0 0
        %1081 = vmatprep.mubr.bf16.mxu0 0
        %1082 = vmatmul.mubr.bf16.gmra.mxu0 %v962
        %v1083 = vpop.f32.mrf.mxu0
        %v1084 = vadd.f32 %v999, %v1083
        %v1085 = vpop.f32.mrf.mxu0
        %v1086 = vpop.f32.mrf.mxu0
        %v1087 = vadd.f32 %v999, %v1086
        %v1088 = vpop.f32.mrf.mxu0
        %1089 = vmatprep.mubr.bf16.mxu0 0
        %1090 = vmatmul.mubr.bf16.gmra.mxu0 %v963
        %v1091 = vpop.f32.mrf.mxu0
        %v1092 = vadd.f32 %v999, %v1091
        %v1093 = vpop.f32.mrf.mxu0
        %v1094 = vpop.f32.mrf.mxu0
        %v1095 = vadd.f32 %v999, %v1094
        %v1096 = vpop.f32.mrf.mxu0
        %1097 = vmatprep.mubr.bf16.mxu0 0
        %1098 = vmatmul.mubr.bf16.gmra.mxu0 %v964
        %v1099 = vpop.f32.mrf.mxu0
        %v1100 = vadd.f32 %v999, %v1099
        %v1101 = vpop.f32.mrf.mxu0
        %v1102 = vpop.f32.mrf.mxu0
        %v1103 = vadd.f32 %v999, %v1102
        %v1104 = vpop.f32.mrf.mxu0
        %1105 = vmatprep.mubr.bf16.mxu0 0
        %1106 = vmatmul.mubr.bf16.gmra.mxu0 %v965
        %v1107 = vpop.f32.mrf.mxu0
        %v1108 = vadd.f32 %v999, %v1107
        %v1109 = vpop.f32.mrf.mxu0
        %v1110 = vpop.f32.mrf.mxu0
        %v1111 = vadd.f32 %v999, %v1110
        %v1112 = vpop.f32.mrf.mxu0
        %1113 = vmatprep.mubr.bf16.mxu0 0
        %1114 = vmatmul.mubr.bf16.gmra.mxu0 %v966
        %v1115 = vpop.f32.mrf.mxu0
        %v1116 = vadd.f32 %v999, %v1115
        %v1117 = vpop.f32.mrf.mxu0
        %v1118 = vpop.f32.mrf.mxu0
        %v1119 = vadd.f32 %v999, %v1118
        %v1120 = vpop.f32.mrf.mxu0
        %1121 = vmatprep.mubr.bf16.mxu0 0
        %1122 = vmatmul.mubr.bf16.gmra.mxu0 %v967
        %v1123 = vpop.f32.mrf.mxu0
        %v1124 = vadd.f32 %v999, %v1123
        %v1125 = vpop.f32.mrf.mxu0
        %v1126 = vpop.f32.mrf.mxu0
        %v1127 = vadd.f32 %v999, %v1126
        %v1128 = vpop.f32.mrf.mxu0
        %1129 = vmatprep.mubr.bf16.mxu0 0
        %1130 = vmatmul.mubr.bf16.gmra.mxu0 %v968
        %v1131 = vpop.f32.mrf.mxu0
        %v1132 = vadd.f32 %v999, %v1131
        %v1133 = vpop.f32.mrf.mxu0
        %v1134 = vpop.f32.mrf.mxu0
        %v1135 = vadd.f32 %v999, %v1134
        %v1136 = vpop.f32.mrf.mxu0
        %1137 = vmatprep.mubr.bf16.mxu0 0
        %1138 = vmatmul.mubr.bf16.gmra.mxu0 %v969
        %v1139 = vpop.f32.mrf.mxu0
        %v1140 = vadd.f32 %v999, %v1139
        %v1141 = vpop.f32.mrf.mxu0
        %v1142 = vpop.f32.mrf.mxu0
        %v1143 = vadd.f32 %v999, %v1142
        %v1144 = vpop.f32.mrf.mxu0
        %1145 = vmatprep.mubr.bf16.mxu0 0
        %1146 = vmatmul.mubr.bf16.gmra.mxu0 %v970
        %v1147 = vpop.f32.mrf.mxu0
        %v1148 = vadd.f32 %v999, %v1147
        %v1149 = vpop.f32.mrf.mxu0
        %v1150 = vpop.f32.mrf.mxu0
        %v1151 = vadd.f32 %v999, %v1150
        %v1152 = vpop.f32.mrf.mxu0
        %1153 = vmatprep.mubr.bf16.mxu0 0
        %1154 = vmatmul.mubr.bf16.gmra.mxu0 %v971
        %v1155 = vpop.f32.mrf.mxu0
        %v1156 = vadd.f32 %v999, %v1155
        %v1157 = vpop.f32.mrf.mxu0
        %v1158 = vpop.f32.mrf.mxu0
        %v1159 = vadd.f32 %v999, %v1158
        %v1160 = vpop.f32.mrf.mxu0
        %1161 = vmatprep.mubr.bf16.mxu0 0
        %1162 = vmatmul.mubr.bf16.gmra.mxu0 %v972
        %v1163 = vpop.f32.mrf.mxu0
        %v1164 = vadd.f32 %v999, %v1163
        %v1165 = vpop.f32.mrf.mxu0
        %v1166 = vpop.f32.mrf.mxu0
        %v1167 = vadd.f32 %v999, %v1166
        %v1168 = vpop.f32.mrf.mxu0
        %1169 = vmatprep.mubr.bf16.mxu0 0
        %1170 = vmatmul.mubr.bf16.gmra.mxu0 %v973
        %v1171 = vpop.f32.mrf.mxu0
        %v1172 = vadd.f32 %v999, %v1171
        %v1173 = vpop.f32.mrf.mxu0
        %v1174 = vpop.f32.mrf.mxu0
        %v1175 = vadd.f32 %v999, %v1174
        %v1176 = vpop.f32.mrf.mxu0
        %1177 = vmatprep.mubr.bf16.mxu0 0
        %1178 = vmatmul.mubr.bf16.gmra.mxu0 %v974
        %v1179 = vpop.f32.mrf.mxu0
        %v1180 = vadd.f32 %v999, %v1179
        %v1181 = vpop.f32.mrf.mxu0
        %v1182 = vpop.f32.mrf.mxu0
        %v1183 = vadd.f32 %v999, %v1182
        %v1184 = vpop.f32.mrf.mxu0
        %1185 = vmatprep.mubr.bf16.mxu0 0
        %1186 = vmatmul.mubr.bf16.gmra.mxu0 %v975
        %v1187 = vpop.f32.mrf.mxu0
        %v1188 = vadd.f32 %v999, %v1187
        %v1189 = vpop.f32.mrf.mxu0
        %v1190 = vpop.f32.mrf.mxu0
        %v1191 = vadd.f32 %v999, %v1190
        %v1192 = vpop.f32.mrf.mxu0
        %1193 = vmatprep.mubr.bf16.mxu0 0
        %1194 = vmatmul.mubr.bf16.gmra.mxu0 %v976
        %v1195 = vpop.f32.mrf.mxu0
        %v1196 = vadd.f32 %v999, %v1195
        %v1197 = vpop.f32.mrf.mxu0
        %v1198 = vpop.f32.mrf.mxu0
        %v1199 = vadd.f32 %v999, %v1198
        %v1200 = vpop.f32.mrf.mxu0
        %1201 = vmatprep.mubr.bf16.mxu0 0
        %1202 = vmatmul.mubr.bf16.gmra.mxu0 %v977
        %v1203 = vpop.f32.mrf.mxu0
        %v1204 = vadd.f32 %v999, %v1203
        %v1205 = vpop.f32.mrf.mxu0
        %v1206 = vpop.f32.mrf.mxu0
        %v1207 = vadd.f32 %v999, %v1206
        %v1208 = vpop.f32.mrf.mxu0
        %1209 = vdwg.mxu0
        %v1210 = vld [vmem:[%s358] sm:$0xff]
        %v1211 = vld [vmem:[%s358 + $0x8] sm:$0xff]
        %v1212 = vld [vmem:[%s358 + $0x10] sm:$0xff]
        %v1213 = vld [vmem:[%s358 + $0x18] sm:$0xff]
        %v1214 = vld [vmem:[%s358 + $0x20] sm:$0xff]
        %v1215 = vld [vmem:[%s358 + $0x28] sm:$0xff]
        %v1216 = vld [vmem:[%s358 + $0x30] sm:$0xff]
        %v1217 = vld [vmem:[%s358 + $0x38] sm:$0xff]
        %v1218 = vld [vmem:[%s358 + $0x40] sm:$0xff]
        %v1219 = vld [vmem:[%s358 + $0x48] sm:$0xff]
        %v1220 = vld [vmem:[%s358 + $0x50] sm:$0xff]
        %v1221 = vld [vmem:[%s358 + $0x58] sm:$0xff]
        %v1222 = vld [vmem:[%s358 + $0x60] sm:$0xff]
        %v1223 = vld [vmem:[%s358 + $0x68] sm:$0xff]
        %v1224 = vld [vmem:[%s358 + $0x70] sm:$0xff]
        %v1225 = vld [vmem:[%s358 + $0x78] sm:$0xff]
        %v1226 = vld [vmem:[%s358 + $0x80] sm:$0xff]
        %v1227 = vld [vmem:[%s358 + $0x88] sm:$0xff]
        %v1228 = vld [vmem:[%s358 + $0x90] sm:$0xff]
        %v1229 = vld [vmem:[%s358 + $0x98] sm:$0xff]
        %v1230 = vld [vmem:[%s358 + $0xa0] sm:$0xff]
        %v1231 = vld [vmem:[%s358 + $0xa8] sm:$0xff]
        %v1232 = vld [vmem:[%s358 + $0xb0] sm:$0xff]
        %v1233 = vld [vmem:[%s358 + $0xb8] sm:$0xff]
        %v1234 = vld [vmem:[%s358 + $0xc0] sm:$0xff]
        %v1235 = vld [vmem:[%s358 + $0xc8] sm:$0xff]
        %v1236 = vld [vmem:[%s358 + $0xd0] sm:$0xff]
        %v1237 = vld [vmem:[%s358 + $0xd8] sm:$0xff]
        %v1238 = vld [vmem:[%s358 + $0xe0] sm:$0xff]
        %v1239 = vld [vmem:[%s358 + $0xe8] sm:$0xff]
        %v1240 = vld [vmem:[%s358 + $0xf0] sm:$0xff]
        %v1241 = vld [vmem:[%s358 + $0xf8] sm:$0xff]
        %v1242 = vlaneseq
        %v1243 = vand.u32 %v1242, 127
        %vm1244 = vcmp.eq.s32.totalorder %v1243, 0
        %vm1245 = vcmp.eq.s32.totalorder %v1243, 1
        %1247 = vset.pattern.permute.xlu0 1
        %1248 = vperm.xlu0 %1247, %v1210
        %v1249 = vpop.permute.xlu0 %1248
        %1252 = vset.pattern.permute.xlu0 1
        %1253 = vperm.xlu0 %1252, %v1211
        %v1254 = vpop.permute.xlu0 %1253
        %1257 = vset.pattern.permute.xlu0 1
        %1258 = vperm.xlu0 %1257, %v1212
        %v1259 = vpop.permute.xlu0 %1258
        %1262 = vset.pattern.permute.xlu0 1
        %1263 = vperm.xlu0 %1262, %v1213
        %v1264 = vpop.permute.xlu0 %1263
        %1267 = vset.pattern.permute.xlu0 1
        %1268 = vperm.xlu0 %1267, %v1214
        %v1269 = vpop.permute.xlu0 %1268
        %1272 = vset.pattern.permute.xlu0 1
        %1273 = vperm.xlu0 %1272, %v1215
        %v1274 = vpop.permute.xlu0 %1273
        %1277 = vset.pattern.permute.xlu0 1
        %1278 = vperm.xlu0 %1277, %v1216
        %v1279 = vpop.permute.xlu0 %1278
        %1282 = vset.pattern.permute.xlu0 1
        %1283 = vperm.xlu0 %1282, %v1217
        %v1284 = vpop.permute.xlu0 %1283
        %1287 = vset.pattern.permute.xlu0 1
        %1288 = vperm.xlu0 %1287, %v1218
        %v1289 = vpop.permute.xlu0 %1288
        %1292 = vset.pattern.permute.xlu0 1
        %1293 = vperm.xlu0 %1292, %v1219
        %v1294 = vpop.permute.xlu0 %1293
        %1297 = vset.pattern.permute.xlu0 1
        %1298 = vperm.xlu0 %1297, %v1220
        %v1299 = vpop.permute.xlu0 %1298
        %1302 = vset.pattern.permute.xlu0 1
        %1303 = vperm.xlu0 %1302, %v1221
        %v1304 = vpop.permute.xlu0 %1303
        %1307 = vset.pattern.permute.xlu0 1
        %1308 = vperm.xlu0 %1307, %v1222
        %v1309 = vpop.permute.xlu0 %1308
        %1312 = vset.pattern.permute.xlu0 1
        %1313 = vperm.xlu0 %1312, %v1223
        %v1314 = vpop.permute.xlu0 %1313
        %1317 = vset.pattern.permute.xlu0 1
        %1318 = vperm.xlu0 %1317, %v1224
        %v1319 = vpop.permute.xlu0 %1318
        %1322 = vset.pattern.permute.xlu0 1
        %1323 = vperm.xlu0 %1322, %v1225
        %v1324 = vpop.permute.xlu0 %1323
        %1327 = vset.pattern.permute.xlu0 1
        %1328 = vperm.xlu0 %1327, %v1226
        %v1329 = vpop.permute.xlu0 %1328
        %1332 = vset.pattern.permute.xlu0 1
        %1333 = vperm.xlu0 %1332, %v1227
        %v1334 = vpop.permute.xlu0 %1333
        %1337 = vset.pattern.permute.xlu0 1
        %1338 = vperm.xlu0 %1337, %v1228
        %v1339 = vpop.permute.xlu0 %1338
        %1342 = vset.pattern.permute.xlu0 1
        %1343 = vperm.xlu0 %1342, %v1229
        %v1344 = vpop.permute.xlu0 %1343
        %1347 = vset.pattern.permute.xlu0 1
        %1348 = vperm.xlu0 %1347, %v1230
        %v1349 = vpop.permute.xlu0 %1348
        %1352 = vset.pattern.permute.xlu0 1
        %1353 = vperm.xlu0 %1352, %v1231
        %v1354 = vpop.permute.xlu0 %1353
        %1357 = vset.pattern.permute.xlu0 1
        %1358 = vperm.xlu0 %1357, %v1232
        %v1359 = vpop.permute.xlu0 %1358
        %1362 = vset.pattern.permute.xlu0 1
        %1363 = vperm.xlu0 %1362, %v1233
        %v1364 = vpop.permute.xlu0 %1363
        %1367 = vset.pattern.permute.xlu0 1
        %1368 = vperm.xlu0 %1367, %v1234
        %v1369 = vpop.permute.xlu0 %1368
        %1372 = vset.pattern.permute.xlu0 1
        %1373 = vperm.xlu0 %1372, %v1235
        %v1374 = vpop.permute.xlu0 %1373
        %1377 = vset.pattern.permute.xlu0 1
        %1378 = vperm.xlu0 %1377, %v1236
        %v1379 = vpop.permute.xlu0 %1378
        %1382 = vset.pattern.permute.xlu0 1
        %1383 = vperm.xlu0 %1382, %v1237
        %v1384 = vpop.permute.xlu0 %1383
        %1387 = vset.pattern.permute.xlu0 1
        %1388 = vperm.xlu0 %1387, %v1238
        %v1389 = vpop.permute.xlu0 %1388
        %1392 = vset.pattern.permute.xlu0 1
        %1393 = vperm.xlu0 %1392, %v1239
        %v1394 = vpop.permute.xlu0 %1393
        %1397 = vset.pattern.permute.xlu0 1
        %1398 = vperm.xlu0 %1397, %v1240
        %v1399 = vpop.permute.xlu0 %1398
        %1402 = vset.pattern.permute.xlu0 1
        %1403 = vperm.xlu0 %1402, %v1241
        %v1404 = vpop.permute.xlu0 %1403
        %v1406 = vsel %vm1245, %v1249, 0.0
        %v1407 = vsel %vm1245, %v1254, 0.0
        %v1408 = vsel %vm1245, %v1259, 0.0
        %v1409 = vsel %vm1245, %v1264, 0.0
        %v1410 = vsel %vm1245, %v1269, 0.0
        %v1411 = vsel %vm1245, %v1274, 0.0
        %v1412 = vsel %vm1245, %v1279, 0.0
        %v1413 = vsel %vm1245, %v1284, 0.0
        %v1414 = vsel %vm1245, %v1289, 0.0
        %v1415 = vsel %vm1245, %v1294, 0.0
        %v1416 = vsel %vm1245, %v1299, 0.0
        %v1417 = vsel %vm1245, %v1304, 0.0
        %v1418 = vsel %vm1245, %v1309, 0.0
        %v1419 = vsel %vm1245, %v1314, 0.0
        %v1420 = vsel %vm1245, %v1319, 0.0
        %v1421 = vsel %vm1245, %v1324, 0.0
        %v1422 = vsel %vm1245, %v1329, 0.0
        %v1423 = vsel %vm1245, %v1334, 0.0
        %v1424 = vsel %vm1245, %v1339, 0.0
        %v1425 = vsel %vm1245, %v1344, 0.0
        %v1426 = vsel %vm1245, %v1349, 0.0
        %v1427 = vsel %vm1245, %v1354, 0.0
        %v1428 = vsel %vm1245, %v1359, 0.0
        %v1429 = vsel %vm1245, %v1364, 0.0
        %v1430 = vsel %vm1245, %v1369, 0.0
        %v1431 = vsel %vm1245, %v1374, 0.0
        %v1432 = vsel %vm1245, %v1379, 0.0
        %v1433 = vsel %vm1245, %v1384, 0.0
        %v1434 = vsel %vm1245, %v1389, 0.0
        %v1435 = vsel %vm1245, %v1394, 0.0
        %v1436 = vsel %vm1245, %v1399, 0.0
        %v1437 = vsel %vm1245, %v1404, 0.0
        %1438 = vset.pattern.permute.xlu0 0
        %1439 = vperm.xlu0 %1438, %v1210
        %v1440 = vpop.permute.xlu0 %1439
        %1442 = vset.pattern.permute.xlu0 0
        %1443 = vperm.xlu0 %1442, %v1211
        %v1444 = vpop.permute.xlu0 %1443
        %1446 = vset.pattern.permute.xlu0 0
        %1447 = vperm.xlu0 %1446, %v1212
        %v1448 = vpop.permute.xlu0 %1447
        %1450 = vset.pattern.permute.xlu0 0
        %1451 = vperm.xlu0 %1450, %v1213
        %v1452 = vpop.permute.xlu0 %1451
        %1454 = vset.pattern.permute.xlu0 0
        %1455 = vperm.xlu0 %1454, %v1214
        %v1456 = vpop.permute.xlu0 %1455
        %1458 = vset.pattern.permute.xlu0 0
        %1459 = vperm.xlu0 %1458, %v1215
        %v1460 = vpop.permute.xlu0 %1459
        %1462 = vset.pattern.permute.xlu0 0
        %1463 = vperm.xlu0 %1462, %v1216
        %v1464 = vpop.permute.xlu0 %1463
        %1466 = vset.pattern.permute.xlu0 0
        %1467 = vperm.xlu0 %1466, %v1217
        %v1468 = vpop.permute.xlu0 %1467
        %1470 = vset.pattern.permute.xlu0 0
        %1471 = vperm.xlu0 %1470, %v1218
        %v1472 = vpop.permute.xlu0 %1471
        %1474 = vset.pattern.permute.xlu0 0
        %1475 = vperm.xlu0 %1474, %v1219
        %v1476 = vpop.permute.xlu0 %1475
        %1478 = vset.pattern.permute.xlu0 0
        %1479 = vperm.xlu0 %1478, %v1220
        %v1480 = vpop.permute.xlu0 %1479
        %1482 = vset.pattern.permute.xlu0 0
        %1483 = vperm.xlu0 %1482, %v1221
        %v1484 = vpop.permute.xlu0 %1483
        %1486 = vset.pattern.permute.xlu0 0
        %1487 = vperm.xlu0 %1486, %v1222
        %v1488 = vpop.permute.xlu0 %1487
        %1490 = vset.pattern.permute.xlu0 0
        %1491 = vperm.xlu0 %1490, %v1223
        %v1492 = vpop.permute.xlu0 %1491
        %1494 = vset.pattern.permute.xlu0 0
        %1495 = vperm.xlu0 %1494, %v1224
        %v1496 = vpop.permute.xlu0 %1495
        %1498 = vset.pattern.permute.xlu0 0
        %1499 = vperm.xlu0 %1498, %v1225
        %v1500 = vpop.permute.xlu0 %1499
        %1502 = vset.pattern.permute.xlu0 0
        %1503 = vperm.xlu0 %1502, %v1226
        %v1504 = vpop.permute.xlu0 %1503
        %1506 = vset.pattern.permute.xlu0 0
        %1507 = vperm.xlu0 %1506, %v1227
        %v1508 = vpop.permute.xlu0 %1507
        %1510 = vset.pattern.permute.xlu0 0
        %1511 = vperm.xlu0 %1510, %v1228
        %v1512 = vpop.permute.xlu0 %1511
        %1514 = vset.pattern.permute.xlu0 0
        %1515 = vperm.xlu0 %1514, %v1229
        %v1516 = vpop.permute.xlu0 %1515
        %1518 = vset.pattern.permute.xlu0 0
        %1519 = vperm.xlu0 %1518, %v1230
        %v1520 = vpop.permute.xlu0 %1519
        %1522 = vset.pattern.permute.xlu0 0
        %1523 = vperm.xlu0 %1522, %v1231
        %v1524 = vpop.permute.xlu0 %1523
        %1526 = vset.pattern.permute.xlu0 0
        %1527 = vperm.xlu0 %1526, %v1232
        %v1528 = vpop.permute.xlu0 %1527
        %1530 = vset.pattern.permute.xlu0 0
        %1531 = vperm.xlu0 %1530, %v1233
        %v1532 = vpop.permute.xlu0 %1531
        %1534 = vset.pattern.permute.xlu0 0
        %1535 = vperm.xlu0 %1534, %v1234
        %v1536 = vpop.permute.xlu0 %1535
        %1538 = vset.pattern.permute.xlu0 0
        %1539 = vperm.xlu0 %1538, %v1235
        %v1540 = vpop.permute.xlu0 %1539
        %1542 = vset.pattern.permute.xlu0 0
        %1543 = vperm.xlu0 %1542, %v1236
        %v1544 = vpop.permute.xlu0 %1543
        %1546 = vset.pattern.permute.xlu0 0
        %1547 = vperm.xlu0 %1546, %v1237
        %v1548 = vpop.permute.xlu0 %1547
        %1550 = vset.pattern.permute.xlu0 0
        %1551 = vperm.xlu0 %1550, %v1238
        %v1552 = vpop.permute.xlu0 %1551
        %1554 = vset.pattern.permute.xlu0 0
        %1555 = vperm.xlu0 %1554, %v1239
        %v1556 = vpop.permute.xlu0 %1555
        %1558 = vset.pattern.permute.xlu0 0
        %1559 = vperm.xlu0 %1558, %v1240
        %v1560 = vpop.permute.xlu0 %1559
        %1562 = vset.pattern.permute.xlu0 0
        %1563 = vperm.xlu0 %1562, %v1241
        %v1564 = vpop.permute.xlu0 %1563
        %v1566 = vsel %vm1244, %v1440, %v1406
        %v1567 = vsel %vm1244, %v1444, %v1407
        %v1568 = vsel %vm1244, %v1448, %v1408
        %v1569 = vsel %vm1244, %v1452, %v1409
        %v1570 = vsel %vm1244, %v1456, %v1410
        %v1571 = vsel %vm1244, %v1460, %v1411
        %v1572 = vsel %vm1244, %v1464, %v1412
        %v1573 = vsel %vm1244, %v1468, %v1413
        %v1574 = vsel %vm1244, %v1472, %v1414
        %v1575 = vsel %vm1244, %v1476, %v1415
        %v1576 = vsel %vm1244, %v1480, %v1416
        %v1577 = vsel %vm1244, %v1484, %v1417
        %v1578 = vsel %vm1244, %v1488, %v1418
        %v1579 = vsel %vm1244, %v1492, %v1419
        %v1580 = vsel %vm1244, %v1496, %v1420
        %v1581 = vsel %vm1244, %v1500, %v1421
        %v1582 = vsel %vm1244, %v1504, %v1422
        %v1583 = vsel %vm1244, %v1508, %v1423
        %v1584 = vsel %vm1244, %v1512, %v1424
        %v1585 = vsel %vm1244, %v1516, %v1425
        %v1586 = vsel %vm1244, %v1520, %v1426
        %v1587 = vsel %vm1244, %v1524, %v1427
        %v1588 = vsel %vm1244, %v1528, %v1428
        %v1589 = vsel %vm1244, %v1532, %v1429
        %v1590 = vsel %vm1244, %v1536, %v1430
        %v1591 = vsel %vm1244, %v1540, %v1431
        %v1592 = vsel %vm1244, %v1544, %v1432
        %v1593 = vsel %vm1244, %v1548, %v1433
        %v1594 = vsel %vm1244, %v1552, %v1434
        %v1595 = vsel %vm1244, %v1556, %v1435
        %v1596 = vsel %vm1244, %v1560, %v1436
        %v1597 = vsel %vm1244, %v1564, %v1437
        %v1598 = vadd.f32 %v1084, %v1566
        %v1599 = vadd.f32 %v1087, %v1567
        %v1600 = vadd.f32 %v1092, %v1568
        %v1601 = vadd.f32 %v1095, %v1569
        %v1602 = vadd.f32 %v1100, %v1570
        %v1603 = vadd.f32 %v1103, %v1571
        %v1604 = vadd.f32 %v1108, %v1572
        %v1605 = vadd.f32 %v1111, %v1573
        %v1606 = vadd.f32 %v1116, %v1574
        %v1607 = vadd.f32 %v1119, %v1575
        %v1608 = vadd.f32 %v1124, %v1576
        %v1609 = vadd.f32 %v1127, %v1577
        %v1610 = vadd.f32 %v1132, %v1578
        %v1611 = vadd.f32 %v1135, %v1579
        %v1612 = vadd.f32 %v1140, %v1580
        %v1613 = vadd.f32 %v1143, %v1581
        %v1614 = vadd.f32 %v1148, %v1582
        %v1615 = vadd.f32 %v1151, %v1583
        %v1616 = vadd.f32 %v1156, %v1584
        %v1617 = vadd.f32 %v1159, %v1585
        %v1618 = vadd.f32 %v1164, %v1586
        %v1619 = vadd.f32 %v1167, %v1587
        %v1620 = vadd.f32 %v1172, %v1588
        %v1621 = vadd.f32 %v1175, %v1589
        %v1622 = vadd.f32 %v1180, %v1590
        %v1623 = vadd.f32 %v1183, %v1591
        %v1624 = vadd.f32 %v1188, %v1592
        %v1625 = vadd.f32 %v1191, %v1593
        %v1626 = vadd.f32 %v1196, %v1594
        %v1627 = vadd.f32 %v1199, %v1595
        %v1628 = vadd.f32 %v1204, %v1596
        %v1629 = vadd.f32 %v1207, %v1597
        %vm1630 = vcmask 64512
        %1631 = vst.msk [vmem:[%s335] sm:$0xff] %vm1630, %v1598
        %1632 = vst.msk [vmem:[%s335 + $0x8] sm:$0xff] %vm1630, %v1599
        %1633 = vst.msk [vmem:[%s335 + $0x10] sm:$0xff] %vm1630, %v1600
        %1634 = vst.msk [vmem:[%s335 + $0x18] sm:$0xff] %vm1630, %v1601
        %1635 = vst.msk [vmem:[%s335 + $0x20] sm:$0xff] %vm1630, %v1602
        %1636 = vst.msk [vmem:[%s335 + $0x28] sm:$0xff] %vm1630, %v1603
        %1637 = vst.msk [vmem:[%s335 + $0x30] sm:$0xff] %vm1630, %v1604
        %1638 = vst.msk [vmem:[%s335 + $0x38] sm:$0xff] %vm1630, %v1605
        %1639 = vst.msk [vmem:[%s335 + $0x40] sm:$0xff] %vm1630, %v1606
        %1640 = vst.msk [vmem:[%s335 + $0x48] sm:$0xff] %vm1630, %v1607
        %1641 = vst.msk [vmem:[%s335 + $0x50] sm:$0xff] %vm1630, %v1608
        %1642 = vst.msk [vmem:[%s335 + $0x58] sm:$0xff] %vm1630, %v1609
        %1643 = vst.msk [vmem:[%s335 + $0x60] sm:$0xff] %vm1630, %v1610
        %1644 = vst.msk [vmem:[%s335 + $0x68] sm:$0xff] %vm1630, %v1611
        %1645 = vst.msk [vmem:[%s335 + $0x70] sm:$0xff] %vm1630, %v1612
        %1646 = vst.msk [vmem:[%s335 + $0x78] sm:$0xff] %vm1630, %v1613
        %1647 = vst.msk [vmem:[%s335 + $0x80] sm:$0xff] %vm1630, %v1614
        %1648 = vst.msk [vmem:[%s335 + $0x88] sm:$0xff] %vm1630, %v1615
        %1649 = vst.msk [vmem:[%s335 + $0x90] sm:$0xff] %vm1630, %v1616
        %1650 = vst.msk [vmem:[%s335 + $0x98] sm:$0xff] %vm1630, %v1617
        %1651 = vst.msk [vmem:[%s335 + $0xa0] sm:$0xff] %vm1630, %v1618
        %1652 = vst.msk [vmem:[%s335 + $0xa8] sm:$0xff] %vm1630, %v1619
        %1653 = vst.msk [vmem:[%s335 + $0xb0] sm:$0xff] %vm1630, %v1620
        %1654 = vst.msk [vmem:[%s335 + $0xb8] sm:$0xff] %vm1630, %v1621
        %1655 = vst.msk [vmem:[%s335 + $0xc0] sm:$0xff] %vm1630, %v1622
        %1656 = vst.msk [vmem:[%s335 + $0xc8] sm:$0xff] %vm1630, %v1623
        %1657 = vst.msk [vmem:[%s335 + $0xd0] sm:$0xff] %vm1630, %v1624
        %1658 = vst.msk [vmem:[%s335 + $0xd8] sm:$0xff] %vm1630, %v1625
        %1659 = vst.msk [vmem:[%s335 + $0xe0] sm:$0xff] %vm1630, %v1626
        %1660 = vst.msk [vmem:[%s335 + $0xe8] sm:$0xff] %vm1630, %v1627
        %1661 = vst.msk [vmem:[%s335 + $0xf0] sm:$0xff] %vm1630, %v1628
        %1662 = vst.msk [vmem:[%s335 + $0xf8] sm:$0xff] %vm1630, %v1629
        %s1663 = sand.u32 %s205, 1
        %s1664 = sand.u32 %s205, 1
        %s1665 = smul.addr %s1664, 256
        %s1666 = scalar_lea.vmem [#allocation2], %s1665
        // Predicated region
        $region53: #{decoder_forward.1} parent=51 // pred_check
          %p1667 = pneg %p215
        $region54: #{decoder_forward.1} parent=51 // pred_check_branch
          %1669 = sbr.rel (%p1667) target = $region56
        $region55: #{decoder_forward.1} parent=51 // pred_region
          %s1670 = smul.u32 32, %s19
          %s1671 = ssub.s32 50, %s1670
          %p1672 = scmp.lt.s32.totalorder %s1671, 32
          %s1673 = scalar_select %p1672, %s1671, 32
          %s1674 = smul.u32 128, %s1673
          %p1675 = scmp.ne.s32.totalorder 0, %s1674
          %s1676 = smul.addr %s1670, 8
          %s1677 = scalar_lea.vmem %s8, %s1676
          // Predicated region
          $region57: #{decoder_forward.1} parent=55 // pred_check
            %p1678 = pneg %p1675
          $region58: #{decoder_forward.1} parent=55 // pred_check_branch
            %1680 = sbr.rel (%p1678) target = $region60
          $region59: #{decoder_forward.1} parent=55 // pred_region
            // Predicated region
            $region61: #{decoder_forward.1} parent=59 // pred_check
              _
            $region62: #{decoder_forward.1} parent=59 // pred_check_branch
              %1682 = sbr.rel (0) target = $region64
            $region63: #{decoder_forward.1} parent=59 // pred_region
              // Predicated region
              $region83: #{decoder_forward.1} parent=63 // pred_check
                _
              $region84: #{decoder_forward.1} parent=63 // pred_check_branch
                %1794 = sbr.rel (0) target = $region86
              $region85: #{decoder_forward.1} parent=63 // pred_region
                %s1795 = sshrl.u32 %s1673, 5
                // While loop
                $region87: #{decoder_forward.1} parent=85 // loop_pre_header
                  _
                $region88: #{decoder_forward.1} parent=85 // loop_header
                  %s1797 = sphi 0, %s1799
                  %p1798 = scmp.ge.s32.totalorder %s1797, %s1795
                  %s1802 = sphi 0, %s1871
                  %s1803 = sphi %s1666, %s1874
                  %s1804 = sphi %s1677, %s1875
                $region89: #{decoder_forward.1} parent=85 // loop_header_branch
                  %1801 = sbr.rel (%p1798) target = $region93
                $region90: #{decoder_forward.1} parent=85 // loop_body
                  %v1805 = vld [vmem:[%s1803] sm:$0xff]
                  %1806 = vst [vmem:[%s1804] sm:$0xff] %v1805
                  %v1807 = vld [vmem:[%s1803 + $0x8] sm:$0xff]
                  %1808 = vst [vmem:[%s1804 + $0x8] sm:$0xff] %v1807
                  %v1809 = vld [vmem:[%s1803 + $0x10] sm:$0xff]
                  %1810 = vst [vmem:[%s1804 + $0x10] sm:$0xff] %v1809
                  %v1811 = vld [vmem:[%s1803 + $0x18] sm:$0xff]
                  %1812 = vst [vmem:[%s1804 + $0x18] sm:$0xff] %v1811
                  %v1813 = vld [vmem:[%s1803 + $0x20] sm:$0xff]
                  %1814 = vst [vmem:[%s1804 + $0x20] sm:$0xff] %v1813
                  %v1815 = vld [vmem:[%s1803 + $0x28] sm:$0xff]
                  %1816 = vst [vmem:[%s1804 + $0x28] sm:$0xff] %v1815
                  %v1817 = vld [vmem:[%s1803 + $0x30] sm:$0xff]
                  %1818 = vst [vmem:[%s1804 + $0x30] sm:$0xff] %v1817
                  %v1819 = vld [vmem:[%s1803 + $0x38] sm:$0xff]
                  %1820 = vst [vmem:[%s1804 + $0x38] sm:$0xff] %v1819
                  %v1821 = vld [vmem:[%s1803 + $0x40] sm:$0xff]
                  %1822 = vst [vmem:[%s1804 + $0x40] sm:$0xff] %v1821
                  %v1823 = vld [vmem:[%s1803 + $0x48] sm:$0xff]
                  %1824 = vst [vmem:[%s1804 + $0x48] sm:$0xff] %v1823
                  %v1825 = vld [vmem:[%s1803 + $0x50] sm:$0xff]
                  %1826 = vst [vmem:[%s1804 + $0x50] sm:$0xff] %v1825
                  %v1827 = vld [vmem:[%s1803 + $0x58] sm:$0xff]
                  %1828 = vst [vmem:[%s1804 + $0x58] sm:$0xff] %v1827
                  %v1829 = vld [vmem:[%s1803 + $0x60] sm:$0xff]
                  %1830 = vst [vmem:[%s1804 + $0x60] sm:$0xff] %v1829
                  %v1831 = vld [vmem:[%s1803 + $0x68] sm:$0xff]
                  %1832 = vst [vmem:[%s1804 + $0x68] sm:$0xff] %v1831
                  %v1833 = vld [vmem:[%s1803 + $0x70] sm:$0xff]
                  %1834 = vst [vmem:[%s1804 + $0x70] sm:$0xff] %v1833
                  %v1835 = vld [vmem:[%s1803 + $0x78] sm:$0xff]
                  %1836 = vst [vmem:[%s1804 + $0x78] sm:$0xff] %v1835
                  %v1837 = vld [vmem:[%s1803 + $0x80] sm:$0xff]
                  %1838 = vst [vmem:[%s1804 + $0x80] sm:$0xff] %v1837
                  %v1839 = vld [vmem:[%s1803 + $0x88] sm:$0xff]
                  %1840 = vst [vmem:[%s1804 + $0x88] sm:$0xff] %v1839
                  %v1841 = vld [vmem:[%s1803 + $0x90] sm:$0xff]
                  %1842 = vst [vmem:[%s1804 + $0x90] sm:$0xff] %v1841
                  %v1843 = vld [vmem:[%s1803 + $0x98] sm:$0xff]
                  %1844 = vst [vmem:[%s1804 + $0x98] sm:$0xff] %v1843
                  %v1845 = vld [vmem:[%s1803 + $0xa0] sm:$0xff]
                  %1846 = vst [vmem:[%s1804 + $0xa0] sm:$0xff] %v1845
                  %v1847 = vld [vmem:[%s1803 + $0xa8] sm:$0xff]
                  %1848 = vst [vmem:[%s1804 + $0xa8] sm:$0xff] %v1847
                  %v1849 = vld [vmem:[%s1803 + $0xb0] sm:$0xff]
                  %1850 = vst [vmem:[%s1804 + $0xb0] sm:$0xff] %v1849
                  %v1851 = vld [vmem:[%s1803 + $0xb8] sm:$0xff]
                  %1852 = vst [vmem:[%s1804 + $0xb8] sm:$0xff] %v1851
                  %v1853 = vld [vmem:[%s1803 + $0xc0] sm:$0xff]
                  %1854 = vst [vmem:[%s1804 + $0xc0] sm:$0xff] %v1853
                  %v1855 = vld [vmem:[%s1803 + $0xc8] sm:$0xff]
                  %1856 = vst [vmem:[%s1804 + $0xc8] sm:$0xff] %v1855
                  %v1857 = vld [vmem:[%s1803 + $0xd0] sm:$0xff]
                  %1858 = vst [vmem:[%s1804 + $0xd0] sm:$0xff] %v1857
                  %v1859 = vld [vmem:[%s1803 + $0xd8] sm:$0xff]
                  %1860 = vst [vmem:[%s1804 + $0xd8] sm:$0xff] %v1859
                  %v1861 = vld [vmem:[%s1803 + $0xe0] sm:$0xff]
                  %1862 = vst [vmem:[%s1804 + $0xe0] sm:$0xff] %v1861
                  %v1863 = vld [vmem:[%s1803 + $0xe8] sm:$0xff]
                  %1864 = vst [vmem:[%s1804 + $0xe8] sm:$0xff] %v1863
                  %v1865 = vld [vmem:[%s1803 + $0xf0] sm:$0xff]
                  %1866 = vst [vmem:[%s1804 + $0xf0] sm:$0xff] %v1865
                  %v1867 = vld [vmem:[%s1803 + $0xf8] sm:$0xff]
                  %1868 = vst [vmem:[%s1804 + $0xf8] sm:$0xff] %v1867
                  %s1869 = sadd.s32 1, %s1802
                  %p1870 = scmp.ge.s32.totalorder %s1869, %s1795
                  %s1871 = scalar_select %p1870, 0, %s1869
                  %s1872 = smul.u32 %s1871, 256
                  %s1873 = smul.u32 %s1871, 256
                  %s1874 = scalar_lea.vmem %s1666, %s1872 [#allocation2]
                  %s1875 = scalar_lea.vmem %s1677, %s1873
                $region91: #{decoder_forward.1} parent=85 // loop_footer
                  %s1799 = sadd.s32 %s1797, 1
                $region92: #{decoder_forward.1} parent=85 // loop_footer_branch
                  %1796 = sbr.rel target = $region88
                $region93: #{decoder_forward.1} parent=85 // loop_exit
                  _
                %s1876 = sshrl.u32 %s1673, 5
                %s1877 = sand.u32 %s1673, 31
                %s1878 = smul.u32 %s1876, 32
                %s1879 = smul.u32 8, %s1878
                %s1880 = scalar_lea.vmem %s1666, %s1879 [#allocation2]
                %s1881 = smul.u32 8, %s1878
                %s1882 = scalar_lea.vmem %s1677, %s1881
                // While loop
                $region94: #{decoder_forward.1} parent=85 // loop_pre_header
                  _
                $region95: #{decoder_forward.1} parent=85 // loop_header
                  %s1884 = sphi 0, %s1886
                  %p1885 = scmp.ge.s32.totalorder %s1884, %s1877
                  %s1889 = sphi 0, %s1896
                  %s1890 = sphi %s1880, %s1899
                  %s1891 = sphi %s1882, %s1900
                $region96: #{decoder_forward.1} parent=85 // loop_header_branch
                  %1888 = sbr.rel (%p1885) target = $region100
                $region97: #{decoder_forward.1} parent=85 // loop_body
                  %v1892 = vld [vmem:[%s1890] sm:$0xff]
                  %1893 = vst [vmem:[%s1891] sm:$0xff] %v1892
                  %s1894 = sadd.s32 1, %s1889
                  %p1895 = scmp.ge.s32.totalorder %s1894, %s1877
                  %s1896 = scalar_select %p1895, 0, %s1894
                  %s1897 = smul.u32 %s1896, 8
                  %s1898 = smul.u32 %s1896, 8
                  %s1899 = scalar_lea.vmem %s1880, %s1897 [#allocation2]
                  %s1900 = scalar_lea.vmem %s1882, %s1898
                $region98: #{decoder_forward.1} parent=85 // loop_footer
                  %s1886 = sadd.s32 %s1884, 1
                $region99: #{decoder_forward.1} parent=85 // loop_footer_branch
                  %1883 = sbr.rel target = $region95
                $region100: #{decoder_forward.1} parent=85 // loop_exit
                  _
              $region86: #{decoder_forward.1} parent=63 // pred_fallthru
                _
              // Predicated region
              $region101: #{decoder_forward.1} parent=63 // pred_check
                _
              $region102: #{decoder_forward.1} parent=63 // pred_check_branch
                %1902 = sbr.rel target = $region104
              $region103: #{decoder_forward.1} parent=63 // pred_region
                _
              $region104: #{decoder_forward.1} parent=63 // pred_fallthru
                _
            $region64: #{decoder_forward.1} parent=59 // pred_fallthru
              _
            // Predicated region
            $region65: #{decoder_forward.1} parent=59 // pred_check
              _
            $region66: #{decoder_forward.1} parent=59 // pred_check_branch
              %1684 = sbr.rel target = $region68
            $region67: #{decoder_forward.1} parent=59 // pred_region
              %s1686 = ssub.s32 256, 1
              %s1687 = sshrl.u32 %s1673, 5
              // While loop
              $region69: #{decoder_forward.1} parent=67 // loop_pre_header
                _
              $region70: #{decoder_forward.1} parent=67 // loop_header
                %s1689 = sphi 0, %s1691
                %p1690 = scmp.ge.s32.totalorder %s1689, %s1687
                %s1694 = sphi 0, %s1763
                %s1695 = sphi %s1666, %s1766
                %s1696 = sphi %s1677, %s1767
              $region71: #{decoder_forward.1} parent=67 // loop_header_branch
                %1693 = sbr.rel (%p1690) target = $region75
              $region72: #{decoder_forward.1} parent=67 // loop_body
                %v1697 = vld [vmem:[%s1695] sm:%s1686]
                %1698 = vst [vmem:[%s1696] sm:%s1686] %v1697
                %v1699 = vld [vmem:[%s1695 + $0x8] sm:%s1686]
                %1700 = vst [vmem:[%s1696 + $0x8] sm:%s1686] %v1699
                %v1701 = vld [vmem:[%s1695 + $0x10] sm:%s1686]
                %1702 = vst [vmem:[%s1696 + $0x10] sm:%s1686] %v1701
                %v1703 = vld [vmem:[%s1695 + $0x18] sm:%s1686]
                %1704 = vst [vmem:[%s1696 + $0x18] sm:%s1686] %v1703
                %v1705 = vld [vmem:[%s1695 + $0x20] sm:%s1686]
                %1706 = vst [vmem:[%s1696 + $0x20] sm:%s1686] %v1705
                %v1707 = vld [vmem:[%s1695 + $0x28] sm:%s1686]
                %1708 = vst [vmem:[%s1696 + $0x28] sm:%s1686] %v1707
                %v1709 = vld [vmem:[%s1695 + $0x30] sm:%s1686]
                %1710 = vst [vmem:[%s1696 + $0x30] sm:%s1686] %v1709
                %v1711 = vld [vmem:[%s1695 + $0x38] sm:%s1686]
                %1712 = vst [vmem:[%s1696 + $0x38] sm:%s1686] %v1711
                %v1713 = vld [vmem:[%s1695 + $0x40] sm:%s1686]
                %1714 = vst [vmem:[%s1696 + $0x40] sm:%s1686] %v1713
                %v1715 = vld [vmem:[%s1695 + $0x48] sm:%s1686]
                %1716 = vst [vmem:[%s1696 + $0x48] sm:%s1686] %v1715
                %v1717 = vld [vmem:[%s1695 + $0x50] sm:%s1686]
                %1718 = vst [vmem:[%s1696 + $0x50] sm:%s1686] %v1717
                %v1719 = vld [vmem:[%s1695 + $0x58] sm:%s1686]
                %1720 = vst [vmem:[%s1696 + $0x58] sm:%s1686] %v1719
                %v1721 = vld [vmem:[%s1695 + $0x60] sm:%s1686]
                %1722 = vst [vmem:[%s1696 + $0x60] sm:%s1686] %v1721
                %v1723 = vld [vmem:[%s1695 + $0x68] sm:%s1686]
                %1724 = vst [vmem:[%s1696 + $0x68] sm:%s1686] %v1723
                %v1725 = vld [vmem:[%s1695 + $0x70] sm:%s1686]
                %1726 = vst [vmem:[%s1696 + $0x70] sm:%s1686] %v1725
                %v1727 = vld [vmem:[%s1695 + $0x78] sm:%s1686]
                %1728 = vst [vmem:[%s1696 + $0x78] sm:%s1686] %v1727
                %v1729 = vld [vmem:[%s1695 + $0x80] sm:%s1686]
                %1730 = vst [vmem:[%s1696 + $0x80] sm:%s1686] %v1729
                %v1731 = vld [vmem:[%s1695 + $0x88] sm:%s1686]
                %1732 = vst [vmem:[%s1696 + $0x88] sm:%s1686] %v1731
                %v1733 = vld [vmem:[%s1695 + $0x90] sm:%s1686]
                %1734 = vst [vmem:[%s1696 + $0x90] sm:%s1686] %v1733
                %v1735 = vld [vmem:[%s1695 + $0x98] sm:%s1686]
                %1736 = vst [vmem:[%s1696 + $0x98] sm:%s1686] %v1735
                %v1737 = vld [vmem:[%s1695 + $0xa0] sm:%s1686]
                %1738 = vst [vmem:[%s1696 + $0xa0] sm:%s1686] %v1737
                %v1739 = vld [vmem:[%s1695 + $0xa8] sm:%s1686]
                %1740 = vst [vmem:[%s1696 + $0xa8] sm:%s1686] %v1739
                %v1741 = vld [vmem:[%s1695 + $0xb0] sm:%s1686]
                %1742 = vst [vmem:[%s1696 + $0xb0] sm:%s1686] %v1741
                %v1743 = vld [vmem:[%s1695 + $0xb8] sm:%s1686]
                %1744 = vst [vmem:[%s1696 + $0xb8] sm:%s1686] %v1743
                %v1745 = vld [vmem:[%s1695 + $0xc0] sm:%s1686]
                %1746 = vst [vmem:[%s1696 + $0xc0] sm:%s1686] %v1745
                %v1747 = vld [vmem:[%s1695 + $0xc8] sm:%s1686]
                %1748 = vst [vmem:[%s1696 + $0xc8] sm:%s1686] %v1747
                %v1749 = vld [vmem:[%s1695 + $0xd0] sm:%s1686]
                %1750 = vst [vmem:[%s1696 + $0xd0] sm:%s1686] %v1749
                %v1751 = vld [vmem:[%s1695 + $0xd8] sm:%s1686]
                %1752 = vst [vmem:[%s1696 + $0xd8] sm:%s1686] %v1751
                %v1753 = vld [vmem:[%s1695 + $0xe0] sm:%s1686]
                %1754 = vst [vmem:[%s1696 + $0xe0] sm:%s1686] %v1753
                %v1755 = vld [vmem:[%s1695 + $0xe8] sm:%s1686]
                %1756 = vst [vmem:[%s1696 + $0xe8] sm:%s1686] %v1755
                %v1757 = vld [vmem:[%s1695 + $0xf0] sm:%s1686]
                %1758 = vst [vmem:[%s1696 + $0xf0] sm:%s1686] %v1757
                %v1759 = vld [vmem:[%s1695 + $0xf8] sm:%s1686]
                %1760 = vst [vmem:[%s1696 + $0xf8] sm:%s1686] %v1759
                %s1761 = sadd.s32 1, %s1694
                %p1762 = scmp.ge.s32.totalorder %s1761, %s1687
                %s1763 = scalar_select %p1762, 0, %s1761
                %s1764 = smul.u32 %s1763, 256
                %s1765 = smul.u32 %s1763, 256
                %s1766 = scalar_lea.vmem %s1666, %s1764 [#allocation2]
                %s1767 = scalar_lea.vmem %s1677, %s1765
              $region73: #{decoder_forward.1} parent=67 // loop_footer
                %s1691 = sadd.s32 %s1689, 1
              $region74: #{decoder_forward.1} parent=67 // loop_footer_branch
                %1688 = sbr.rel target = $region70
              $region75: #{decoder_forward.1} parent=67 // loop_exit
                _
              %s1768 = sshrl.u32 %s1673, 5
              %s1769 = sand.u32 %s1673, 31
              %s1770 = smul.u32 %s1768, 32
              %s1771 = smul.u32 8, %s1770
              %s1772 = scalar_lea.vmem %s1666, %s1771 [#allocation2]
              %s1773 = smul.u32 8, %s1770
              %s1774 = scalar_lea.vmem %s1677, %s1773
              // While loop
              $region76: #{decoder_forward.1} parent=67 // loop_pre_header
                _
              $region77: #{decoder_forward.1} parent=67 // loop_header
                %s1776 = sphi 0, %s1778
                %p1777 = scmp.ge.s32.totalorder %s1776, %s1769
                %s1781 = sphi 0, %s1788
                %s1782 = sphi %s1772, %s1791
                %s1783 = sphi %s1774, %s1792
              $region78: #{decoder_forward.1} parent=67 // loop_header_branch
                %1780 = sbr.rel (%p1777) target = $region82
              $region79: #{decoder_forward.1} parent=67 // loop_body
                %v1784 = vld [vmem:[%s1782] sm:%s1686]
                %1785 = vst [vmem:[%s1783] sm:%s1686] %v1784
                %s1786 = sadd.s32 1, %s1781
                %p1787 = scmp.ge.s32.totalorder %s1786, %s1769
                %s1788 = scalar_select %p1787, 0, %s1786
                %s1789 = smul.u32 %s1788, 8
                %s1790 = smul.u32 %s1788, 8
                %s1791 = scalar_lea.vmem %s1772, %s1789 [#allocation2]
                %s1792 = scalar_lea.vmem %s1774, %s1790
              $region80: #{decoder_forward.1} parent=67 // loop_footer
                %s1778 = sadd.s32 %s1776, 1
              $region81: #{decoder_forward.1} parent=67 // loop_footer_branch
                %1775 = sbr.rel target = $region77
              $region82: #{decoder_forward.1} parent=67 // loop_exit
                _
            $region68: #{decoder_forward.1} parent=59 // pred_fallthru
              _
          $region60: #{decoder_forward.1} parent=55 // pred_fallthru
            _
          %1903 = vnop
        $region56: #{decoder_forward.1} parent=51 // pred_fallthru
          _
      $region52: #{decoder_forward.1} parent=5 // pred_fallthru
        _
      %p1904 = scmp.le.s32.totalorder 2, %s14
      // Predicated region
      $region105: #{decoder_forward.1} parent=5 // pred_check
        %p1905 = pneg %p1904
      $region106: #{decoder_forward.1} parent=5 // pred_check_branch
        %1907 = sbr.rel (%p1905) target = $region108
      $region107: #{decoder_forward.1} parent=5 // pred_region
        %s1908 = ssub.s32 %s14, 2
        // Predicated region
        $region109: #{decoder_forward.1} parent=107 // pred_check
          %p1909 = pneg %p221
        $region110: #{decoder_forward.1} parent=107 // pred_check_branch
          %1911 = sbr.rel (%p1909) target = $region112
        $region111: #{decoder_forward.1} parent=107 // pred_region
          %s1912 = sand.u32 %s206, 1
          %s1913 = sand.u32 %s206, 1
          %s1914 = smul.addr %s1913, 256
          %s1915 = scalar_lea.vmem [#allocation2], %s1914
        $region112: #{decoder_forward.1} parent=107 // pred_fallthru
          _
      $region108: #{decoder_forward.1} parent=5 // pred_fallthru
        _
    $region6: #{decoder_forward.1} parent=1 // loop_footer
      %s18 = sadd.s32 1, %s14
    $region7: #{decoder_forward.1} parent=1 // loop_footer_branch
      %13 = sbr.rel target = $region3
    $region8: #{decoder_forward.1} parent=1 // loop_exit
      _

</llo_original>
